<compile_context>
chip_gen: v7x
topology: tpu7x:2x2x1
jax: 0.10.0
libtpu: 0.0.40
codegen_flags: <defaults>
</compile_context>

<pallas_src>
import functools
import math

import jax
import jax.numpy as jnp
from jax import lax
from jax.experimental import pallas as pl
from jax.experimental.pallas import tpu as pltpu


# ---------------------------------------------------------------------------
# One-pass kernel: whole kv sequence in a single tile (no scratch, no branch)
# ---------------------------------------------------------------------------
def _qkv_attention_onepass_kernel(q_ref, k_ref, v_ref, o_ref, *, scale_sq):
    """Block layouts:
      q_ref : (bh_tile, C, tq)   native dtype
      k_ref : (bh_tile, C, T)    native dtype
      v_ref : (bh_tile, C, T)    native dtype
      o_ref : (bh_tile, C, tq)   native dtype
    """
    # Fold both ch**-0.25 scalings into q (python scalar -> stays native dtype).
    q = q_ref[...] * scale_sq                           # (bh, C, tq)
    k = k_ref[...]                                      # (bh, C, T)
    v = v_ref[...]                                      # (bh, C, T)

    # scores[b, t, s] = sum_c q[b, c, t] * k[b, c, s]   (== 'bct,bcs->bts')
    s = lax.dot_general(
        q, k, dimension_numbers=(((1,), (1,)), ((0,), (0,))),
        preferred_element_type=jnp.float32)             # (bh, tq, T) f32

    # Full softmax over the kv axis in f32 (matches torch.softmax(w.float())).
    m = jnp.max(s, axis=-1, keepdims=True)
    p = jnp.exp(s - m)
    l = jnp.sum(p, axis=-1, keepdims=True)
    if o_ref.dtype == jnp.float32:
        p = p / l                                       # exact for f32 outputs
    else:
        p = p * pl.reciprocal(l, approx=True)           # EUP approx, free slot

    # out[b, c, t] = sum_s v[b, c, s] * p[b, t, s]      (== 'bts,bcs->bct')
    # Normalized probabilities cast back to the input dtype (same as torch);
    # result lands directly in (C, tq) layout -> no output transpose at all.
    pv = lax.dot_general(
        v, p.astype(v.dtype), dimension_numbers=(((2,), (2,)), ((0,), (0,))),
        preferred_element_type=jnp.float32)             # (bh, C, tq) f32
    o_ref[...] = pv.astype(o_ref.dtype)


# ---------------------------------------------------------------------------
# Flash kernel: online softmax over kv tiles (long sequences)
# ---------------------------------------------------------------------------
def _qkv_attention_flash_kernel(q_ref, k_ref, v_ref, o_ref, m_ref, l_ref,
                                acc_ref, *, scale_sq):
    """One (bh_tile x q_tile) output block; grid axis 2 walks the kv tiles.

    Block layouts:
      q_ref  : (bh_tile, C, tq)    native dtype
      k_ref  : (bh_tile, C, tkv)   native dtype
      v_ref  : (bh_tile, C, tkv)   native dtype
      o_ref  : (bh_tile, C, tq)    native dtype
      m_ref  : (bh_tile, tq, 1)    f32 running row max
      l_ref  : (bh_tile, tq, 1)    f32 running row sum
      acc_ref: (bh_tile, tq, C)    f32 running (p @ v) accumulator
    """
    kv_idx = pl.program_id(2)

    @pl.when(kv_idx == 0)
    def _init():
        m_ref[...] = jnp.full_like(m_ref, -jnp.inf)
        l_ref[...] = jnp.zeros_like(l_ref)
        acc_ref[...] = jnp.zeros_like(acc_ref)

    q = q_ref[...] * scale_sq          # (bh_tile, C, tq)
    k = k_ref[...]                     # (bh_tile, C, tkv)
    v = v_ref[...]                     # (bh_tile, C, tkv)

    # scores[b, t, s] = sum_c q[b, c, t] * k[b, c, s]   (== 'bct,bcs->bts')
    s = lax.dot_general(
        q, k, dimension_numbers=(((1,), (1,)), ((0,), (0,))),
        preferred_element_type=jnp.float32)             # (bh_tile, tq, tkv)

    # Online softmax over the kv axis (f32).
    m_prev = m_ref[...]
    m_new = jnp.maximum(m_prev, jnp.max(s, axis=-1, keepdims=True))
    alpha = jnp.exp(m_prev - m_new)                     # (bh_tile, tq, 1)
    p = jnp.exp(s - m_new)                              # (bh_tile, tq, tkv)
    l_ref[...] = alpha * l_ref[...] + jnp.sum(p, axis=-1, keepdims=True)

    # pv[b, t, c] = sum_s p[b, t, s] * v[b, c, s]       (== 'bts,bcs->btc')
    pv = lax.dot_general(
        p.astype(v.dtype), v, dimension_numbers=(((2,), (2,)), ((0,), (0,))),
        preferred_element_type=jnp.float32)             # (bh_tile, tq, C)

    acc_ref[...] = alpha * acc_ref[...] + pv
    m_ref[...] = m_new

    @pl.when(kv_idx == pl.num_programs(2) - 1)
    def _finalize():
        approx = o_ref.dtype != jnp.float32
        inv_l = pl.reciprocal(l_ref[...], approx=approx)
        out = acc_ref[...] * inv_l                      # (bh_tile, tq, C)
        # Single (tq, C)->(C, tq) transpose per output tile (once per q-tile,
        # not per kv step); keeps the stored output block lane-dense along T.
        o_ref[...] = jnp.swapaxes(out, 1, 2).astype(o_ref.dtype)


# ---------------------------------------------------------------------------
# Tiling helpers
# ---------------------------------------------------------------------------
def _pick_seq_tile(length):
    """Largest of {512, 256, 128} that divides T, else the full length."""
    if length <= 512:
        return length
    for cand in (512, 256, 128):
        if length % cand == 0:
            return cand
    return length   # ragged T: single full-length tile (block == full dim)


def _largest_divisor_leq(n, cap):
    for d in range(min(n, cap), 0, -1):
        if n % d == 0:
            return d
    return 1


def _vmem_estimate(bh_tile, ch, tq, tkv, itemsize):
    io = 2 * 2 * bh_tile * ch * (tq + tkv) * itemsize      # dbl-buffered q,k,v,o
    scratch = bh_tile * tq * (ch + 2) * 4                  # m, l, acc (f32)
    work = 3 * bh_tile * tq * tkv * 4                      # s, p + f32 temps
    return io + scratch + work


def _pick_bh_tile(bh, ch, tq, tkv, itemsize, budget=20 * 1024 * 1024):
    tile = _largest_divisor_leq(bh, 16)
    while tile > 1 and _vmem_estimate(tile, ch, tq, tkv, itemsize) > budget:
        tile = _largest_divisor_leq(bh, tile - 1)
    return tile


# ---------------------------------------------------------------------------
# Wrapper
# ---------------------------------------------------------------------------
def qkv_attention(qkv, n_heads, *, seq_tile=None, bh_tile=None):
    """qkv: [N, 3*H*C, T] -> [N, H*C, T]; same forward as QKVAttention."""
    bs, width, length = qkv.shape
    assert width % (3 * n_heads) == 0
    ch = width // (3 * n_heads)
    # (ch ** -0.25) applied to both q and k == ch ** -0.5 applied to q only.
    scale_sq = 1.0 / math.sqrt(ch)

    q, k, v = jnp.split(qkv, 3, axis=1)
    bh = bs * n_heads
    q = q.reshape(bh, ch, length)
    k = k.reshape(bh, ch, length)
    v = v.reshape(bh, ch, length)

    if seq_tile is None:
        seq_tile = _pick_seq_tile(length)
    assert length % seq_tile == 0
    assert seq_tile == length or seq_tile % 128 == 0, (
        "sequence tiles must be 128-aligned or cover the full length")
    tq = tkv = seq_tile
    kv_tiles = length // tkv

    itemsize = jnp.dtype(qkv.dtype).itemsize
    if bh_tile is None:
        bh_tile = _pick_bh_tile(bh, ch, tq, tkv, itemsize)
    assert bh % bh_tile == 0

    compiler_common = dict(vmem_limit_bytes=32 * 1024 * 1024)

    if kv_tiles == 1:
        # Whole kv sequence in one tile: scratch-free one-pass kernel,
        # no online softmax, no output transpose.
        grid = (bh // bh_tile, length // tq)
        kernel = functools.partial(_qkv_attention_onepass_kernel,
                                   scale_sq=scale_sq)
        out = pl.pallas_call(
            kernel,
            out_shape=jax.ShapeDtypeStruct((bh, ch, length), qkv.dtype),
            grid_spec=pltpu.PrefetchScalarGridSpec(
                num_scalar_prefetch=0,
                grid=grid,
                in_specs=[
                    pl.BlockSpec((bh_tile, ch, tq), lambda b, qi: (b, 0, qi)),
                    pl.BlockSpec((bh_tile, ch, length), lambda b, qi: (b, 0, 0)),
                    pl.BlockSpec((bh_tile, ch, length), lambda b, qi: (b, 0, 0)),
                ],
                out_specs=pl.BlockSpec((bh_tile, ch, tq),
                                       lambda b, qi: (b, 0, qi)),
            ),
            compiler_params=pltpu.CompilerParams(
                dimension_semantics=("parallel", "parallel"),
                **compiler_common,
            ),
        )(q, k, v)
    else:
        grid = (bh // bh_tile, length // tq, kv_tiles)

        q_spec = pl.BlockSpec((bh_tile, ch, tq), lambda b, qi, ki: (b, 0, qi))
        kv_spec = pl.BlockSpec((bh_tile, ch, tkv), lambda b, qi, ki: (b, 0, ki))
        o_spec = pl.BlockSpec((bh_tile, ch, tq), lambda b, qi, ki: (b, 0, qi))

        kernel = functools.partial(_qkv_attention_flash_kernel,
                                   scale_sq=scale_sq)
        out = pl.pallas_call(
            kernel,
            out_shape=jax.ShapeDtypeStruct((bh, ch, length), qkv.dtype),
            grid_spec=pltpu.PrefetchScalarGridSpec(
                num_scalar_prefetch=0,
                grid=grid,
                in_specs=[q_spec, kv_spec, kv_spec],
                out_specs=o_spec,
                scratch_shapes=[
                    pltpu.VMEM((bh_tile, tq, 1), jnp.float32),   # running max
                    pltpu.VMEM((bh_tile, tq, 1), jnp.float32),   # running sum
                    pltpu.VMEM((bh_tile, tq, ch), jnp.float32),  # accumulator
                ],
            ),
            compiler_params=pltpu.CompilerParams(
                # bh / q-tile axes shard across TensorCores; kv is the reduction.
                dimension_semantics=("parallel", "parallel", "arbitrary"),
                **compiler_common,
            ),
        )(q, k, v)

    return out.reshape(bs, n_heads * ch, length)


# ---------------------------------------------------------------------------
# Pure-JAX reference (mirrors the PyTorch forward)
# ---------------------------------------------------------------------------
def _reference(qkv, n_heads):
    bs, width, length = qkv.shape
    ch = width // (3 * n_heads)
    q, k, v = jnp.split(qkv, 3, axis=1)
    scale = 1.0 / math.sqrt(math.sqrt(ch))
    q = (q * scale).reshape(bs * n_heads, ch, length)
    k = (k * scale).reshape(bs * n_heads, ch, length)
    v = v.reshape(bs * n_heads, ch, length)
    w = jnp.einsum("bct,bcs->bts", q, k, precision=lax.Precision.HIGHEST)
    w = jax.nn.softmax(w.astype(jnp.float32), axis=-1).astype(w.dtype)
    a = jnp.einsum("bts,bcs->bct", w, v, precision=lax.Precision.HIGHEST)
    return a.reshape(bs, -1, length)


if __name__ == "__main__":
    # NOTE: count_flops / count_flops_attn is a thop profiling hook, not part
    # of the forward pass, so it has no kernel equivalent (nothing to port).

    # Config 1: tiny shapes implied by the module -> one-pass kernel,
    # 8 heads batched per grid step.
    n_heads, N, C, T = 4, 2, 8, 16          # qkv width = 3*H*C = 96
    qkv = jax.random.normal(jax.random.PRNGKey(0), (N, 3 * n_heads * C, T),
                            dtype=jnp.float32)
    out = jax.block_until_ready(qkv_attention(qkv, n_heads))
    ref = _reference(qkv, n_heads)
    assert out.shape == (N, n_heads * C, T)
    assert jnp.allclose(out, ref, atol=2e-4, rtol=2e-4), (
        float(jnp.max(jnp.abs(out - ref))))

    # Config 2: exercises the tiled flash path
    # (2 q-tiles x 2 kv-tiles of 128 with online softmax).
    n_heads2, N2, C2, T2 = 2, 1, 16, 256
    qkv2 = jax.random.normal(jax.random.PRNGKey(0), (N2, 3 * n_heads2 * C2, T2),
                             dtype=jnp.float32)
    out2 = jax.block_until_ready(qkv_attention(qkv2, n_heads2, seq_tile=128))
    ref2 = _reference(qkv2, n_heads2)
    assert out2.shape == (N2, n_heads2 * C2, T2)
    assert jnp.allclose(out2, ref2, atol=2e-4, rtol=2e-4), (
        float(jnp.max(jnp.abs(out2 - ref2))))

    # Config 3: one-pass kernel with a 128-aligned sequence (T=256 <= 512).
    n_heads3, N3, C3, T3 = 2, 1, 32, 256
    qkv3 = jax.random.normal(jax.random.PRNGKey(0), (N3, 3 * n_heads3 * C3, T3),
                             dtype=jnp.float32)
    out3 = jax.block_until_ready(qkv_attention(qkv3, n_heads3))
    ref3 = _reference(qkv3, n_heads3)
    assert out3.shape == (N3, n_heads3 * C3, T3)
    assert jnp.allclose(out3, ref3, atol=2e-4, rtol=2e-4), (
        float(jnp.max(jnp.abs(out3 - ref3))))

    print("KERNEL_OK")
</pallas_src>

<mosaic_0001>
module attributes {stable_mosaic.version = 11 : i64} {
  func.func @_qkv_attention_onepass_kernel(%arg0: i32, %arg1: i32, %arg2: memref<8x8x16xf32, #tpu.memory_space<vmem>>, %arg3: memref<8x8x16xf32, #tpu.memory_space<vmem>>, %arg4: memref<8x8x16xf32, #tpu.memory_space<vmem>>, %arg5: memref<8x8x16xf32, #tpu.memory_space<vmem>>) attributes {dimension_semantics = [#tpu.dimension_semantics<parallel>, #tpu.dimension_semantics<parallel>], iteration_bounds = array<i64: 1, 1>, scalar_prefetch = 0 : i64, scratch_operands = 0 : i64, tpu.core_type = #tpu.core_type<tc>, window_params = [{transform_indices = @transform_0, window_bounds = array<i64: 8, 8, 16>}, {transform_indices = @transform_1, window_bounds = array<i64: 8, 8, 16>}, {transform_indices = @transform_2, window_bounds = array<i64: 8, 8, 16>}, {transform_indices = @transform_3, window_bounds = array<i64: 8, 8, 16>}]} {
    %c0 = arith.constant 0 : index
    %c0_0 = arith.constant 0 : index
    %c0_1 = arith.constant 0 : index
    %0 = vector.load %arg2[%c0, %c0_0, %c0_1] : memref<8x8x16xf32, #tpu.memory_space<vmem>>, vector<8x8x16xf32>
    %cst = arith.constant 0.353553385 : f32
    %1 = vector.broadcast %cst : f32 to vector<8x8x16xf32>
    %2 = arith.mulf %0, %1 : vector<8x8x16xf32>
    %c0_2 = arith.constant 0 : index
    %c0_3 = arith.constant 0 : index
    %c0_4 = arith.constant 0 : index
    %3 = vector.load %arg3[%c0_2, %c0_3, %c0_4] : memref<8x8x16xf32, #tpu.memory_space<vmem>>, vector<8x8x16xf32>
    %c0_5 = arith.constant 0 : index
    %c0_6 = arith.constant 0 : index
    %c0_7 = arith.constant 0 : index
    %4 = vector.load %arg4[%c0_5, %c0_6, %c0_7] : memref<8x8x16xf32, #tpu.memory_space<vmem>>, vector<8x8x16xf32>
    %cst_8 = arith.constant dense<0.000000e+00> : vector<8x16x16xf32>
    %5 = tpu.matmul %2, %3, %cst_8 {dimension_numbers = #tpu.dot_dimension_numbers<[1], [1], [2], [2], [0, 0, 0, 2, 1, 2], [0], [0]>} : vector<8x8x16xf32>, vector<8x8x16xf32>, vector<8x16x16xf32> -> vector<8x16x16xf32>
    %cst_9 = arith.constant dense<0xFF800000> : vector<8x16xf32>
    %6 = vector.multi_reduction <maximumf>, %5, %cst_9 [2] : vector<8x16x16xf32> to vector<8x16xf32>
    %7 = vector.shape_cast %6 : vector<8x16xf32> to vector<8x16x1xf32>
    %8 = vector.broadcast %7 : vector<8x16x1xf32> to vector<8x16x16xf32>
    %9 = arith.subf %5, %8 : vector<8x16x16xf32>
    %10 = math.exp %9 : vector<8x16x16xf32>
    %cst_10 = arith.constant dense<0.000000e+00> : vector<8x16xf32>
    %11 = vector.multi_reduction <add>, %10, %cst_10 [2] : vector<8x16x16xf32> to vector<8x16xf32>
    %12 = vector.shape_cast %11 : vector<8x16xf32> to vector<8x16x1xf32>
    %13 = vector.broadcast %12 : vector<8x16x1xf32> to vector<8x16x16xf32>
    %14 = arith.divf %10, %13 : vector<8x16x16xf32>
    %cst_11 = arith.constant dense<0.000000e+00> : vector<8x8x16xf32>
    %15 = tpu.matmul %4, %14, %cst_11 {dimension_numbers = #tpu.dot_dimension_numbers<[2], [2], [1], [1], [0, 0, 0, 1, 1, 1], [0], [0]>} : vector<8x8x16xf32>, vector<8x16x16xf32>, vector<8x8x16xf32> -> vector<8x8x16xf32>
    %c0_12 = arith.constant 0 : index
    %c0_13 = arith.constant 0 : index
    %c0_14 = arith.constant 0 : index
    %16 = vector.load %arg5[%c0_12, %c0_13, %c0_14] : memref<8x8x16xf32, #tpu.memory_space<vmem>>, vector<8x8x16xf32>
    tpu.vector_store %arg5[%c0_12, %c0_13, %c0_14], %15 {strides = array<i32>} : memref<8x8x16xf32, #tpu.memory_space<vmem>>, vector<8x8x16xf32>,
    return
  }
  func.func @transform_0(%arg0: i32, %arg1: i32) -> (i32, i32, i32) {
    %c0_i32 = arith.constant 0 : i32
    %c0_i32_0 = arith.constant 0 : i32
    return %arg0, %c0_i32, %arg1 : i32, i32, i32
  }
  func.func @transform_1(%arg0: i32, %arg1: i32) -> (i32, i32, i32) {
    %c0_i32 = arith.constant 0 : i32
    %c0_i32_0 = arith.constant 0 : i32
    %c0_i32_1 = arith.constant 0 : i32
    return %arg0, %c0_i32, %c0_i32_0 : i32, i32, i32
  }
  func.func @transform_2(%arg0: i32, %arg1: i32) -> (i32, i32, i32) {
    %c0_i32 = arith.constant 0 : i32
    %c0_i32_0 = arith.constant 0 : i32
    %c0_i32_1 = arith.constant 0 : i32
    return %arg0, %c0_i32, %c0_i32_0 : i32, i32, i32
  }
  func.func @transform_3(%arg0: i32, %arg1: i32) -> (i32, i32, i32) {
    %c0_i32 = arith.constant 0 : i32
    %c0_i32_0 = arith.constant 0 : i32
    return %arg0, %c0_i32, %arg1 : i32, i32, i32
  }
}

</mosaic_0001>

<llo_original>
// kernel: tpu_custom_call.1
$region0: #{tpu_custom_call.1}
  #allocation0 [shape = 'u32[]', space=smem, size = 0x4, offset = 0x4, fixed_abs, tag = 'smem constant byte address 0x4 - core index']
  #allocation1 [shape = 'u32[144,128]{1,0:T(1,128)}', space=vmem, size = 0x12000, scoped, tag = 'internal scratch']
  %s0 = inlined_call_operand.hbm [shape: f32[8,8,16], index: 0, kind: input, shape index: {}]
  %s1 = inlined_call_operand.hbm [shape: f32[8,8,16], index: 1, kind: input, shape index: {}]
  %s2 = inlined_call_operand.hbm [shape: f32[8,8,16], index: 2, kind: input, shape index: {}]
  %s3 = inlined_call_operand.hbm [shape: f32[8,8,16], index: 3, kind: output, shape index: {}]
  %s4 = sld [smem:[#allocation0]]
  $region34: #{tpu_custom_call.1} parent=0
    _
  %s6 = ssub.s32 1, %s4
  %s7 = scalar_select 0, %s6, %s4
  $region1: #{tpu_custom_call.1} parent=0
    #allocation2 [shape = 'u8[32768]{0}', space=vmem, size = 0x8000, scoped, tag = 'input window, operand 0, single buffered']
    #allocation3 [shape = 's32[1]{0}', space=sflag, size = 0x4, scoped, tag = 'scoped memory for tpu_custom_call.1']
    #allocation4 [shape = 's32[1]{0}', space=sflag, size = 0x4, scoped, tag = 'scoped memory for tpu_custom_call.1']
    #allocation5 [shape = 'u8[32768]{0}', space=vmem, size = 0x8000, scoped, tag = 'input window, operand 1, single buffered']
    #allocation6 [shape = 's32[1]{0}', space=sflag, size = 0x4, scoped, tag = 'scoped memory for tpu_custom_call.1']
    #allocation7 [shape = 'u8[32768]{0}', space=vmem, size = 0x8000, scoped, tag = 'input window, operand 2, single buffered']
    #allocation8 [shape = 'u8[32768]{0}', space=vmem, size = 0x8000, scoped, tag = 'output window, operand 0, single buffered']
    %8 = vsyncpa [#allocation3], 0
    %9 = vsyncpa [#allocation6], 0
    %10 = vsyncpa [#allocation4], 0
    // Predicated region
    $region2: #{tpu_custom_call.1} parent=1 // pred_check
      _
    $region3: #{tpu_custom_call.1} parent=1 // pred_check_branch
      %12 = sbr.rel (0) target = $region5
    $region4: #{tpu_custom_call.1} parent=1 // pred_region
      %s14 = ssub.s32 1024, 1024
      %15 = vsyncadd [#allocation3], %s14
      %s16 = sshll.u32 [#allocation2], 4
      %s17 = int_to_ptr.vmem [resolvable:$true] %s16
      %22 = dma.hbm_to_vmem [thread:$0]  %s0, 1024, %s17, [#allocation3], 128, 128, 8
    $region5: #{tpu_custom_call.1} parent=1 // pred_fallthru
      _
    // Predicated region
    $region6: #{tpu_custom_call.1} parent=1 // pred_check
      _
    $region7: #{tpu_custom_call.1} parent=1 // pred_check_branch
      %24 = sbr.rel (0) target = $region9
    $region8: #{tpu_custom_call.1} parent=1 // pred_region
      %s26 = ssub.s32 1024, 1024
      %27 = vsyncadd [#allocation6], %s26
      %s28 = sshll.u32 [#allocation5], 4
      %s29 = int_to_ptr.vmem [resolvable:$true] %s28
      %34 = dma.hbm_to_vmem [thread:$0]  %s1, 1024, %s29, [#allocation6], 128, 128, 8
    $region9: #{tpu_custom_call.1} parent=1 // pred_fallthru
      _
    // Predicated region
    $region10: #{tpu_custom_call.1} parent=1 // pred_check
      _
    $region11: #{tpu_custom_call.1} parent=1 // pred_check_branch
      %36 = sbr.rel (0) target = $region13
    $region12: #{tpu_custom_call.1} parent=1 // pred_region
      %s38 = ssub.s32 1024, 1024
      %39 = vsyncadd [#allocation6], %s38
      %s40 = sshll.u32 [#allocation7], 4
      %s41 = int_to_ptr.vmem [resolvable:$true] %s40
      %46 = dma.hbm_to_vmem [thread:$0]  %s2, 1024, %s41, [#allocation6], 128, 128, 8
    $region13: #{tpu_custom_call.1} parent=1 // pred_fallthru
      _
    // Predicated region
    $region14: #{tpu_custom_call.1} parent=1 // pred_check
      _
    $region15: #{tpu_custom_call.1} parent=1 // pred_check_branch
      %48 = sbr.rel (0) target = $region17
    $region16: #{tpu_custom_call.1} parent=1 // pred_region
      %49 = dma.done [#allocation3], 1024
    $region17: #{tpu_custom_call.1} parent=1 // pred_fallthru
      _
    // Predicated region
    $region18: #{tpu_custom_call.1} parent=1 // pred_check
      _
    $region19: #{tpu_custom_call.1} parent=1 // pred_check_branch
      %51 = sbr.rel (0) target = $region21
    $region20: #{tpu_custom_call.1} parent=1 // pred_region
      %52 = dma.done [#allocation6], 1024
    $region21: #{tpu_custom_call.1} parent=1 // pred_fallthru
      _
    // Predicated region
    $region22: #{tpu_custom_call.1} parent=1 // pred_check
      _
    $region23: #{tpu_custom_call.1} parent=1 // pred_check_branch
      %54 = sbr.rel (0) target = $region25
    $region24: #{tpu_custom_call.1} parent=1 // pred_region
      %55 = dma.done [#allocation6], 1024
    $region25: #{tpu_custom_call.1} parent=1 // pred_fallthru
      _
    %v56 = vld [vmem:[#allocation2] sm:$0xff]
    %v57 = vld [vmem:[#allocation2 + $0x8] sm:$0xff]
    %v58 = vld [vmem:[#allocation2 + $0x10] sm:$0xff]
    %v59 = vld [vmem:[#allocation2 + $0x18] sm:$0xff]
    %v60 = vld [vmem:[#allocation2 + $0x20] sm:$0xff]
    %v61 = vld [vmem:[#allocation2 + $0x28] sm:$0xff]
    %v62 = vld [vmem:[#allocation2 + $0x30] sm:$0xff]
    %v63 = vld [vmem:[#allocation2 + $0x38] sm:$0xff]
    %v64 = vmul.f32 %v56, 0.35355338
    %v65 = vmul.f32 %v57, 0.35355338
    %v66 = vmul.f32 %v58, 0.35355338
    %v67 = vmul.f32 %v59, 0.35355338
    %v68 = vmul.f32 %v60, 0.35355338
    %v69 = vmul.f32 %v61, 0.35355338
    %v70 = vmul.f32 %v62, 0.35355338
    %v71 = vmul.f32 %v63, 0.35355338
    %v72 = vld [vmem:[#allocation5] sm:$0xff]
    %v73 = vld [vmem:[#allocation5 + $0x8] sm:$0xff]
    %v74 = vld [vmem:[#allocation5 + $0x10] sm:$0xff]
    %v75 = vld [vmem:[#allocation5 + $0x18] sm:$0xff]
    %v76 = vld [vmem:[#allocation5 + $0x20] sm:$0xff]
    %v77 = vld [vmem:[#allocation5 + $0x28] sm:$0xff]
    %v78 = vld [vmem:[#allocation5 + $0x30] sm:$0xff]
    %v79 = vld [vmem:[#allocation5 + $0x38] sm:$0xff]
    %v80 = vld [vmem:[#allocation7] sm:$0xff]
    %v81 = vld [vmem:[#allocation7 + $0x8] sm:$0xff]
    %v82 = vld [vmem:[#allocation7 + $0x10] sm:$0xff]
    %v83 = vld [vmem:[#allocation7 + $0x18] sm:$0xff]
    %v84 = vld [vmem:[#allocation7 + $0x20] sm:$0xff]
    %v85 = vld [vmem:[#allocation7 + $0x28] sm:$0xff]
    %v86 = vld [vmem:[#allocation7 + $0x30] sm:$0xff]
    %v87 = vld [vmem:[#allocation7 + $0x38] sm:$0xff]
    %88 = vxpose.xlu0.b32.start [1/16] %v64, 128
    %89 = vxpose.xlu0.b32.cont [2/16] 0.0, 128
    %90 = vxpose.xlu0.b32.cont [3/16] 0.0, 128
    %91 = vxpose.xlu0.b32.cont [4/16] 0.0, 128
    %92 = vxpose.xlu0.b32.cont [5/16] 0.0, 128
    %93 = vxpose.xlu0.b32.cont [6/16] 0.0, 128
    %94 = vxpose.xlu0.b32.cont [7/16] 0.0, 128
    %95 = vxpose.xlu0.b32.cont [8/16] 0.0, 128
    %96 = vxpose.xlu0.b32.cont [9/16] 0.0, 128
    %97 = vxpose.xlu0.b32.cont [10/16] 0.0, 128
    %98 = vxpose.xlu0.b32.cont [11/16] 0.0, 128
    %99 = vxpose.xlu0.b32.cont [12/16] 0.0, 128
    %100 = vxpose.xlu0.b32.cont [13/16] 0.0, 128
    %101 = vxpose.xlu0.b32.cont [14/16] 0.0, 128
    %102 = vxpose.xlu0.b32.cont [15/16] 0.0, 128
    %103 = vxpose.xlu0.b32.end [16/16] 0.0, 128
    %v104 = vpop.trf.xlu0
    %v105 = vpop.trf.xlu0
    %v106 = vpop.trf.xlu0
    %v107 = vpop.trf.xlu0
    %v108 = vpop.trf.xlu0
    %v109 = vpop.trf.xlu0
    %v110 = vpop.trf.xlu0
    %v111 = vpop.trf.xlu0
    %v112 = vpop.trf.xlu0
    %v113 = vpop.trf.xlu0
    %v114 = vpop.trf.xlu0
    %v115 = vpop.trf.xlu0
    %v116 = vpop.trf.xlu0
    %v117 = vpop.trf.xlu0
    %v118 = vpop.trf.xlu0
    %v119 = vpop.trf.xlu0
    %vm120 = vcmask 64512
    %v122 = vsel %vm120, %v104, 0
    %v125 = vsel %vm120, %v105, 0
    %127 = vmatprep.subr.mxu0 0.0
    %128 = vmatpush1.msra.mxu0 %v72
    %129 = vmatprep.subr.mxu0 0.0
    %130 = vmatpush1.msra.mxu0 0.0
    %131 = vmatprep.subr.mxu0 0.0
    %132 = vmatpush1.msra.mxu0 0.0
    %133 = vmatprep.subr.mxu0 0.0
    %134 = vmatpush1.msra.mxu0 0.0
    %135 = vmatprep.subr.mxu0 0.0
    %136 = vmatpush1.msra.mxu0 0.0
    %137 = vmatprep.subr.mxu0 0.0
    %138 = vmatpush1.msra.mxu0 0.0
    %139 = vmatprep.subr.mxu0 0.0
    %140 = vmatpush1.msra.mxu0 0.0
    %141 = vmatprep.subr.mxu0 0.0
    %142 = vmatpush1.msra.mxu0 0.0
    %143 = vmatprep.subr.mxu0 0.0
    %144 = vmatpush1.msra.mxu0 0.0
    %145 = vmatprep.subr.mxu0 0.0
    %146 = vmatpush1.msra.mxu0 0.0
    %147 = vmatprep.subr.mxu0 0.0
    %148 = vmatpush1.msra.mxu0 0.0
    %149 = vmatprep.subr.mxu0 0.0
    %150 = vmatpush1.msra.mxu0 0.0
    %151 = vmatprep.subr.mxu0 0.0
    %152 = vmatpush1.msra.mxu0 0.0
    %153 = vmatprep.subr.mxu0 0.0
    %154 = vmatpush1.msra.mxu0 0.0
    %155 = vmatprep.subr.mxu0 0.0
    %156 = vmatpush1.msra.mxu0 0.0
    %157 = vmatprep.subr.mxu0 0.0
    %158 = vmatpush1.msra.mxu0 0.0
    %159 = vmatprep.subr.mxu0 0.0
    %160 = vmatpush1.msra.mxu0 0.0
    %161 = vmatprep.subr.mxu0 0.0
    %162 = vmatpush1.msra.mxu0 0.0
    %163 = vmatprep.subr.mxu0 0.0
    %164 = vmatpush1.msra.mxu0 0.0
    %165 = vmatprep.subr.mxu0 0.0
    %166 = vmatpush1.msra.mxu0 0.0
    %167 = vmatprep.subr.mxu0 0.0
    %168 = vmatpush1.msra.mxu0 0.0
    %169 = vmatprep.subr.mxu0 0.0
    %170 = vmatpush1.msra.mxu0 0.0
    %171 = vmatprep.subr.mxu0 0.0
    %172 = vmatpush1.msra.mxu0 0.0
    %173 = vmatprep.subr.mxu0 0.0
    %174 = vmatpush1.msra.mxu0 0.0
    %175 = vmatprep.subr.mxu0 0.0
    %176 = vmatpush1.msra.mxu0 0.0
    %177 = vmatprep.subr.mxu0 0.0
    %178 = vmatpush1.msra.mxu0 0.0
    %179 = vmatprep.subr.mxu0 0.0
    %180 = vmatpush1.msra.mxu0 0.0
    %181 = vmatprep.subr.mxu0 0.0
    %182 = vmatpush1.msra.mxu0 0.0
    %183 = vmatprep.subr.mxu0 0.0
    %184 = vmatpush1.msra.mxu0 0.0
    %185 = vmatprep.subr.mxu0 0.0
    %186 = vmatpush1.msra.mxu0 0.0
    %187 = vmatprep.subr.mxu0 0.0
    %188 = vmatpush1.msra.mxu0 0.0
    %189 = vmatprep.subr.mxu0 0.0
    %190 = vmatpush1.msra.mxu0 0.0
    %191 = vmatprep.mubr.f32.mxu0 0.0
    %192 = vmatmul.mubr.f32.gmra.mrb[0].mxu0 %v122
    %v193 = vpop.f32.mrb[0].mxu0
    %v194 = vadd.f32 0.0, %v193
    %v195 = vpop.f32.mrb[0].mxu0
    %196 = vmatprep.mubr.f32.mxu0 0.0
    %197 = vmatmul.mubr.f32.gmra.mrb[0].mxu0 %v125
    %v198 = vpop.f32.mrb[0].mxu0
    %v199 = vadd.f32 0.0, %v198
    %v200 = vpop.f32.mrb[0].mxu0
    %201 = vdwg.mxu0
    %202 = vxpose.xlu0.b32.start [1/16] %v65, 128
    %203 = vxpose.xlu0.b32.cont [2/16] 0.0, 128
    %204 = vxpose.xlu0.b32.cont [3/16] 0.0, 128
    %205 = vxpose.xlu0.b32.cont [4/16] 0.0, 128
    %206 = vxpose.xlu0.b32.cont [5/16] 0.0, 128
    %207 = vxpose.xlu0.b32.cont [6/16] 0.0, 128
    %208 = vxpose.xlu0.b32.cont [7/16] 0.0, 128
    %209 = vxpose.xlu0.b32.cont [8/16] 0.0, 128
    %210 = vxpose.xlu0.b32.cont [9/16] 0.0, 128
    %211 = vxpose.xlu0.b32.cont [10/16] 0.0, 128
    %212 = vxpose.xlu0.b32.cont [11/16] 0.0, 128
    %213 = vxpose.xlu0.b32.cont [12/16] 0.0, 128
    %214 = vxpose.xlu0.b32.cont [13/16] 0.0, 128
    %215 = vxpose.xlu0.b32.cont [14/16] 0.0, 128
    %216 = vxpose.xlu0.b32.cont [15/16] 0.0, 128
    %217 = vxpose.xlu0.b32.end [16/16] 0.0, 128
    %v218 = vpop.trf.xlu0
    %v219 = vpop.trf.xlu0
    %v220 = vpop.trf.xlu0
    %v221 = vpop.trf.xlu0
    %v222 = vpop.trf.xlu0
    %v223 = vpop.trf.xlu0
    %v224 = vpop.trf.xlu0
    %v225 = vpop.trf.xlu0
    %v226 = vpop.trf.xlu0
    %v227 = vpop.trf.xlu0
    %v228 = vpop.trf.xlu0
    %v229 = vpop.trf.xlu0
    %v230 = vpop.trf.xlu0
    %v231 = vpop.trf.xlu0
    %v232 = vpop.trf.xlu0
    %v233 = vpop.trf.xlu0
    %v235 = vsel %vm120, %v218, 0
    %v238 = vsel %vm120, %v219, 0
    %240 = vmatprep.subr.mxu0 0.0
    %241 = vmatpush1.msra.mxu0 %v73
    %242 = vmatprep.subr.mxu0 0.0
    %243 = vmatpush1.msra.mxu0 0.0
    %244 = vmatprep.subr.mxu0 0.0
    %245 = vmatpush1.msra.mxu0 0.0
    %246 = vmatprep.subr.mxu0 0.0
    %247 = vmatpush1.msra.mxu0 0.0
    %248 = vmatprep.subr.mxu0 0.0
    %249 = vmatpush1.msra.mxu0 0.0
    %250 = vmatprep.subr.mxu0 0.0
    %251 = vmatpush1.msra.mxu0 0.0
    %252 = vmatprep.subr.mxu0 0.0
    %253 = vmatpush1.msra.mxu0 0.0
    %254 = vmatprep.subr.mxu0 0.0
    %255 = vmatpush1.msra.mxu0 0.0
    %256 = vmatprep.subr.mxu0 0.0
    %257 = vmatpush1.msra.mxu0 0.0
    %258 = vmatprep.subr.mxu0 0.0
    %259 = vmatpush1.msra.mxu0 0.0
    %260 = vmatprep.subr.mxu0 0.0
    %261 = vmatpush1.msra.mxu0 0.0
    %262 = vmatprep.subr.mxu0 0.0
    %263 = vmatpush1.msra.mxu0 0.0
    %264 = vmatprep.subr.mxu0 0.0
    %265 = vmatpush1.msra.mxu0 0.0
    %266 = vmatprep.subr.mxu0 0.0
    %267 = vmatpush1.msra.mxu0 0.0
    %268 = vmatprep.subr.mxu0 0.0
    %269 = vmatpush1.msra.mxu0 0.0
    %270 = vmatprep.subr.mxu0 0.0
    %271 = vmatpush1.msra.mxu0 0.0
    %272 = vmatprep.subr.mxu0 0.0
    %273 = vmatpush1.msra.mxu0 0.0
    %274 = vmatprep.subr.mxu0 0.0
    %275 = vmatpush1.msra.mxu0 0.0
    %276 = vmatprep.subr.mxu0 0.0
    %277 = vmatpush1.msra.mxu0 0.0
    %278 = vmatprep.subr.mxu0 0.0
    %279 = vmatpush1.msra.mxu0 0.0
    %280 = vmatprep.subr.mxu0 0.0
    %281 = vmatpush1.msra.mxu0 0.0
    %282 = vmatprep.subr.mxu0 0.0
    %283 = vmatpush1.msra.mxu0 0.0
    %284 = vmatprep.subr.mxu0 0.0
    %285 = vmatpush1.msra.mxu0 0.0
    %286 = vmatprep.subr.mxu0 0.0
    %287 = vmatpush1.msra.mxu0 0.0
    %288 = vmatprep.subr.mxu0 0.0
    %289 = vmatpush1.msra.mxu0 0.0
    %290 = vmatprep.subr.mxu0 0.0
    %291 = vmatpush1.msra.mxu0 0.0
    %292 = vmatprep.subr.mxu0 0.0
    %293 = vmatpush1.msra.mxu0 0.0
    %294 = vmatprep.subr.mxu0 0.0
    %295 = vmatpush1.msra.mxu0 0.0
    %296 = vmatprep.subr.mxu0 0.0
    %297 = vmatpush1.msra.mxu0 0.0
    %298 = vmatprep.subr.mxu0 0.0
    %299 = vmatpush1.msra.mxu0 0.0
    %300 = vmatprep.subr.mxu0 0.0
    %301 = vmatpush1.msra.mxu0 0.0
    %302 = vmatprep.subr.mxu0 0.0
    %303 = vmatpush1.msra.mxu0 0.0
    %304 = vmatprep.mubr.f32.mxu0 0.0
    %305 = vmatmul.mubr.f32.gmra.mrb[0].mxu0 %v235
    %v306 = vpop.f32.mrb[0].mxu0
    %v307 = vadd.f32 0.0, %v306
    %v308 = vpop.f32.mrb[0].mxu0
    %309 = vmatprep.mubr.f32.mxu0 0.0
    %310 = vmatmul.mubr.f32.gmra.mrb[0].mxu0 %v238
    %v311 = vpop.f32.mrb[0].mxu0
    %v312 = vadd.f32 0.0, %v311
    %v313 = vpop.f32.mrb[0].mxu0
    %314 = vdwg.mxu0
    %315 = vxpose.xlu0.b32.start [1/16] %v66, 128
    %316 = vxpose.xlu0.b32.cont [2/16] 0.0, 128
    %317 = vxpose.xlu0.b32.cont [3/16] 0.0, 128
    %318 = vxpose.xlu0.b32.cont [4/16] 0.0, 128
    %319 = vxpose.xlu0.b32.cont [5/16] 0.0, 128
    %320 = vxpose.xlu0.b32.cont [6/16] 0.0, 128
    %321 = vxpose.xlu0.b32.cont [7/16] 0.0, 128
    %322 = vxpose.xlu0.b32.cont [8/16] 0.0, 128
    %323 = vxpose.xlu0.b32.cont [9/16] 0.0, 128
    %324 = vxpose.xlu0.b32.cont [10/16] 0.0, 128
    %325 = vxpose.xlu0.b32.cont [11/16] 0.0, 128
    %326 = vxpose.xlu0.b32.cont [12/16] 0.0, 128
    %327 = vxpose.xlu0.b32.cont [13/16] 0.0, 128
    %328 = vxpose.xlu0.b32.cont [14/16] 0.0, 128
    %329 = vxpose.xlu0.b32.cont [15/16] 0.0, 128
    %330 = vxpose.xlu0.b32.end [16/16] 0.0, 128
    %v331 = vpop.trf.xlu0
    %v332 = vpop.trf.xlu0
    %v333 = vpop.trf.xlu0
    %v334 = vpop.trf.xlu0
    %v335 = vpop.trf.xlu0
    %v336 = vpop.trf.xlu0
    %v337 = vpop.trf.xlu0
    %v338 = vpop.trf.xlu0
    %v339 = vpop.trf.xlu0
    %v340 = vpop.trf.xlu0
    %v341 = vpop.trf.xlu0
    %v342 = vpop.trf.xlu0
    %v343 = vpop.trf.xlu0
    %v344 = vpop.trf.xlu0
    %v345 = vpop.trf.xlu0
    %v346 = vpop.trf.xlu0
    %v348 = vsel %vm120, %v331, 0
    %v351 = vsel %vm120, %v332, 0
    %353 = vmatprep.subr.mxu0 0.0
    %354 = vmatpush1.msra.mxu0 %v74
    %355 = vmatprep.subr.mxu0 0.0
    %356 = vmatpush1.msra.mxu0 0.0
    %357 = vmatprep.subr.mxu0 0.0
    %358 = vmatpush1.msra.mxu0 0.0
    %359 = vmatprep.subr.mxu0 0.0
    %360 = vmatpush1.msra.mxu0 0.0
    %361 = vmatprep.subr.mxu0 0.0
    %362 = vmatpush1.msra.mxu0 0.0
    %363 = vmatprep.subr.mxu0 0.0
    %364 = vmatpush1.msra.mxu0 0.0
    %365 = vmatprep.subr.mxu0 0.0
    %366 = vmatpush1.msra.mxu0 0.0
    %367 = vmatprep.subr.mxu0 0.0
    %368 = vmatpush1.msra.mxu0 0.0
    %369 = vmatprep.subr.mxu0 0.0
    %370 = vmatpush1.msra.mxu0 0.0
    %371 = vmatprep.subr.mxu0 0.0
    %372 = vmatpush1.msra.mxu0 0.0
    %373 = vmatprep.subr.mxu0 0.0
    %374 = vmatpush1.msra.mxu0 0.0
    %375 = vmatprep.subr.mxu0 0.0
    %376 = vmatpush1.msra.mxu0 0.0
    %377 = vmatprep.subr.mxu0 0.0
    %378 = vmatpush1.msra.mxu0 0.0
    %379 = vmatprep.subr.mxu0 0.0
    %380 = vmatpush1.msra.mxu0 0.0
    %381 = vmatprep.subr.mxu0 0.0
    %382 = vmatpush1.msra.mxu0 0.0
    %383 = vmatprep.subr.mxu0 0.0
    %384 = vmatpush1.msra.mxu0 0.0
    %385 = vmatprep.subr.mxu0 0.0
    %386 = vmatpush1.msra.mxu0 0.0
    %387 = vmatprep.subr.mxu0 0.0
    %388 = vmatpush1.msra.mxu0 0.0
    %389 = vmatprep.subr.mxu0 0.0
    %390 = vmatpush1.msra.mxu0 0.0
    %391 = vmatprep.subr.mxu0 0.0
    %392 = vmatpush1.msra.mxu0 0.0
    %393 = vmatprep.subr.mxu0 0.0
    %394 = vmatpush1.msra.mxu0 0.0
    %395 = vmatprep.subr.mxu0 0.0
    %396 = vmatpush1.msra.mxu0 0.0
    %397 = vmatprep.subr.mxu0 0.0
    %398 = vmatpush1.msra.mxu0 0.0
    %399 = vmatprep.subr.mxu0 0.0
    %400 = vmatpush1.msra.mxu0 0.0
    %401 = vmatprep.subr.mxu0 0.0
    %402 = vmatpush1.msra.mxu0 0.0
    %403 = vmatprep.subr.mxu0 0.0
    %404 = vmatpush1.msra.mxu0 0.0
    %405 = vmatprep.subr.mxu0 0.0
    %406 = vmatpush1.msra.mxu0 0.0
    %407 = vmatprep.subr.mxu0 0.0
    %408 = vmatpush1.msra.mxu0 0.0
    %409 = vmatprep.subr.mxu0 0.0
    %410 = vmatpush1.msra.mxu0 0.0
    %411 = vmatprep.subr.mxu0 0.0
    %412 = vmatpush1.msra.mxu0 0.0
    %413 = vmatprep.subr.mxu0 0.0
    %414 = vmatpush1.msra.mxu0 0.0
    %415 = vmatprep.subr.mxu0 0.0
    %416 = vmatpush1.msra.mxu0 0.0
    %417 = vmatprep.mubr.f32.mxu0 0.0
    %418 = vmatmul.mubr.f32.gmra.mrb[0].mxu0 %v348
    %v419 = vpop.f32.mrb[0].mxu0
    %v420 = vadd.f32 0.0, %v419
    %v421 = vpop.f32.mrb[0].mxu0
    %422 = vmatprep.mubr.f32.mxu0 0.0
    %423 = vmatmul.mubr.f32.gmra.mrb[0].mxu0 %v351
    %v424 = vpop.f32.mrb[0].mxu0
    %v425 = vadd.f32 0.0, %v424
    %v426 = vpop.f32.mrb[0].mxu0
    %427 = vdwg.mxu0
    %428 = vxpose.xlu0.b32.start [1/16] %v67, 128
    %429 = vxpose.xlu0.b32.cont [2/16] 0.0, 128
    %430 = vxpose.xlu0.b32.cont [3/16] 0.0, 128
    %431 = vxpose.xlu0.b32.cont [4/16] 0.0, 128
    %432 = vxpose.xlu0.b32.cont [5/16] 0.0, 128
    %433 = vxpose.xlu0.b32.cont [6/16] 0.0, 128
    %434 = vxpose.xlu0.b32.cont [7/16] 0.0, 128
    %435 = vxpose.xlu0.b32.cont [8/16] 0.0, 128
    %436 = vxpose.xlu0.b32.cont [9/16] 0.0, 128
    %437 = vxpose.xlu0.b32.cont [10/16] 0.0, 128
    %438 = vxpose.xlu0.b32.cont [11/16] 0.0, 128
    %439 = vxpose.xlu0.b32.cont [12/16] 0.0, 128
    %440 = vxpose.xlu0.b32.cont [13/16] 0.0, 128
    %441 = vxpose.xlu0.b32.cont [14/16] 0.0, 128
    %442 = vxpose.xlu0.b32.cont [15/16] 0.0, 128
    %443 = vxpose.xlu0.b32.end [16/16] 0.0, 128
    %v444 = vpop.trf.xlu0
    %v445 = vpop.trf.xlu0
    %v446 = vpop.trf.xlu0
    %v447 = vpop.trf.xlu0
    %v448 = vpop.trf.xlu0
    %v449 = vpop.trf.xlu0
    %v450 = vpop.trf.xlu0
    %v451 = vpop.trf.xlu0
    %v452 = vpop.trf.xlu0
    %v453 = vpop.trf.xlu0
    %v454 = vpop.trf.xlu0
    %v455 = vpop.trf.xlu0
    %v456 = vpop.trf.xlu0
    %v457 = vpop.trf.xlu0
    %v458 = vpop.trf.xlu0
    %v459 = vpop.trf.xlu0
    %v461 = vsel %vm120, %v444, 0
    %v464 = vsel %vm120, %v445, 0
    %466 = vmatprep.subr.mxu0 0.0
    %467 = vmatpush1.msra.mxu0 %v75
    %468 = vmatprep.subr.mxu0 0.0
    %469 = vmatpush1.msra.mxu0 0.0
    %470 = vmatprep.subr.mxu0 0.0
    %471 = vmatpush1.msra.mxu0 0.0
    %472 = vmatprep.subr.mxu0 0.0
    %473 = vmatpush1.msra.mxu0 0.0
    %474 = vmatprep.subr.mxu0 0.0
    %475 = vmatpush1.msra.mxu0 0.0
    %476 = vmatprep.subr.mxu0 0.0
    %477 = vmatpush1.msra.mxu0 0.0
    %478 = vmatprep.subr.mxu0 0.0
    %479 = vmatpush1.msra.mxu0 0.0
    %480 = vmatprep.subr.mxu0 0.0
    %481 = vmatpush1.msra.mxu0 0.0
    %482 = vmatprep.subr.mxu0 0.0
    %483 = vmatpush1.msra.mxu0 0.0
    %484 = vmatprep.subr.mxu0 0.0
    %485 = vmatpush1.msra.mxu0 0.0
    %486 = vmatprep.subr.mxu0 0.0
    %487 = vmatpush1.msra.mxu0 0.0
    %488 = vmatprep.subr.mxu0 0.0
    %489 = vmatpush1.msra.mxu0 0.0
    %490 = vmatprep.subr.mxu0 0.0
    %491 = vmatpush1.msra.mxu0 0.0
    %492 = vmatprep.subr.mxu0 0.0
    %493 = vmatpush1.msra.mxu0 0.0
    %494 = vmatprep.subr.mxu0 0.0
    %495 = vmatpush1.msra.mxu0 0.0
    %496 = vmatprep.subr.mxu0 0.0
    %497 = vmatpush1.msra.mxu0 0.0
    %498 = vmatprep.subr.mxu0 0.0
    %499 = vmatpush1.msra.mxu0 0.0
    %500 = vmatprep.subr.mxu0 0.0
    %501 = vmatpush1.msra.mxu0 0.0
    %502 = vmatprep.subr.mxu0 0.0
    %503 = vmatpush1.msra.mxu0 0.0
    %504 = vmatprep.subr.mxu0 0.0
    %505 = vmatpush1.msra.mxu0 0.0
    %506 = vmatprep.subr.mxu0 0.0
    %507 = vmatpush1.msra.mxu0 0.0
    %508 = vmatprep.subr.mxu0 0.0
    %509 = vmatpush1.msra.mxu0 0.0
    %510 = vmatprep.subr.mxu0 0.0
    %511 = vmatpush1.msra.mxu0 0.0
    %512 = vmatprep.subr.mxu0 0.0
    %513 = vmatpush1.msra.mxu0 0.0
    %514 = vmatprep.subr.mxu0 0.0
    %515 = vmatpush1.msra.mxu0 0.0
    %516 = vmatprep.subr.mxu0 0.0
    %517 = vmatpush1.msra.mxu0 0.0
    %518 = vmatprep.subr.mxu0 0.0
    %519 = vmatpush1.msra.mxu0 0.0
    %520 = vmatprep.subr.mxu0 0.0
    %521 = vmatpush1.msra.mxu0 0.0
    %522 = vmatprep.subr.mxu0 0.0
    %523 = vmatpush1.msra.mxu0 0.0
    %524 = vmatprep.subr.mxu0 0.0
    %525 = vmatpush1.msra.mxu0 0.0
    %526 = vmatprep.subr.mxu0 0.0
    %527 = vmatpush1.msra.mxu0 0.0
    %528 = vmatprep.subr.mxu0 0.0
    %529 = vmatpush1.msra.mxu0 0.0
    %530 = vmatprep.mubr.f32.mxu0 0.0
    %531 = vmatmul.mubr.f32.gmra.mrb[0].mxu0 %v461
    %v532 = vpop.f32.mrb[0].mxu0
    %v533 = vadd.f32 0.0, %v532
    %v534 = vpop.f32.mrb[0].mxu0
    %535 = vmatprep.mubr.f32.mxu0 0.0
    %536 = vmatmul.mubr.f32.gmra.mrb[0].mxu0 %v464
    %v537 = vpop.f32.mrb[0].mxu0
    %v538 = vadd.f32 0.0, %v537
    %v539 = vpop.f32.mrb[0].mxu0
    %540 = vdwg.mxu0
    %541 = vxpose.xlu0.b32.start [1/16] %v68, 128
    %542 = vxpose.xlu0.b32.cont [2/16] 0.0, 128
    %543 = vxpose.xlu0.b32.cont [3/16] 0.0, 128
    %544 = vxpose.xlu0.b32.cont [4/16] 0.0, 128
    %545 = vxpose.xlu0.b32.cont [5/16] 0.0, 128
    %546 = vxpose.xlu0.b32.cont [6/16] 0.0, 128
    %547 = vxpose.xlu0.b32.cont [7/16] 0.0, 128
    %548 = vxpose.xlu0.b32.cont [8/16] 0.0, 128
    %549 = vxpose.xlu0.b32.cont [9/16] 0.0, 128
    %550 = vxpose.xlu0.b32.cont [10/16] 0.0, 128
    %551 = vxpose.xlu0.b32.cont [11/16] 0.0, 128
    %552 = vxpose.xlu0.b32.cont [12/16] 0.0, 128
    %553 = vxpose.xlu0.b32.cont [13/16] 0.0, 128
    %554 = vxpose.xlu0.b32.cont [14/16] 0.0, 128
    %555 = vxpose.xlu0.b32.cont [15/16] 0.0, 128
    %556 = vxpose.xlu0.b32.end [16/16] 0.0, 128
    %v557 = vpop.trf.xlu0
    %v558 = vpop.trf.xlu0
    %v559 = vpop.trf.xlu0
    %v560 = vpop.trf.xlu0
    %v561 = vpop.trf.xlu0
    %v562 = vpop.trf.xlu0
    %v563 = vpop.trf.xlu0
    %v564 = vpop.trf.xlu0
    %v565 = vpop.trf.xlu0
    %v566 = vpop.trf.xlu0
    %v567 = vpop.trf.xlu0
    %v568 = vpop.trf.xlu0
    %v569 = vpop.trf.xlu0
    %v570 = vpop.trf.xlu0
    %v571 = vpop.trf.xlu0
    %v572 = vpop.trf.xlu0
    %v574 = vsel %vm120, %v557, 0
    %v577 = vsel %vm120, %v558, 0
    %579 = vmatprep.subr.mxu0 0.0
    %580 = vmatpush1.msra.mxu0 %v76
    %581 = vmatprep.subr.mxu0 0.0
    %582 = vmatpush1.msra.mxu0 0.0
    %583 = vmatprep.subr.mxu0 0.0
    %584 = vmatpush1.msra.mxu0 0.0
    %585 = vmatprep.subr.mxu0 0.0
    %586 = vmatpush1.msra.mxu0 0.0
    %587 = vmatprep.subr.mxu0 0.0
    %588 = vmatpush1.msra.mxu0 0.0
    %589 = vmatprep.subr.mxu0 0.0
    %590 = vmatpush1.msra.mxu0 0.0
    %591 = vmatprep.subr.mxu0 0.0
    %592 = vmatpush1.msra.mxu0 0.0
    %593 = vmatprep.subr.mxu0 0.0
    %594 = vmatpush1.msra.mxu0 0.0
    %595 = vmatprep.subr.mxu0 0.0
    %596 = vmatpush1.msra.mxu0 0.0
    %597 = vmatprep.subr.mxu0 0.0
    %598 = vmatpush1.msra.mxu0 0.0
    %599 = vmatprep.subr.mxu0 0.0
    %600 = vmatpush1.msra.mxu0 0.0
    %601 = vmatprep.subr.mxu0 0.0
    %602 = vmatpush1.msra.mxu0 0.0
    %603 = vmatprep.subr.mxu0 0.0
    %604 = vmatpush1.msra.mxu0 0.0
    %605 = vmatprep.subr.mxu0 0.0
    %606 = vmatpush1.msra.mxu0 0.0
    %607 = vmatprep.subr.mxu0 0.0
    %608 = vmatpush1.msra.mxu0 0.0
    %609 = vmatprep.subr.mxu0 0.0
    %610 = vmatpush1.msra.mxu0 0.0
    %611 = vmatprep.subr.mxu0 0.0
    %612 = vmatpush1.msra.mxu0 0.0
    %613 = vmatprep.subr.mxu0 0.0
    %614 = vmatpush1.msra.mxu0 0.0
    %615 = vmatprep.subr.mxu0 0.0
    %616 = vmatpush1.msra.mxu0 0.0
    %617 = vmatprep.subr.mxu0 0.0
    %618 = vmatpush1.msra.mxu0 0.0
    %619 = vmatprep.subr.mxu0 0.0
    %620 = vmatpush1.msra.mxu0 0.0
    %621 = vmatprep.subr.mxu0 0.0
    %622 = vmatpush1.msra.mxu0 0.0
    %623 = vmatprep.subr.mxu0 0.0
    %624 = vmatpush1.msra.mxu0 0.0
    %625 = vmatprep.subr.mxu0 0.0
    %626 = vmatpush1.msra.mxu0 0.0
    %627 = vmatprep.subr.mxu0 0.0
    %628 = vmatpush1.msra.mxu0 0.0
    %629 = vmatprep.subr.mxu0 0.0
    %630 = vmatpush1.msra.mxu0 0.0
    %631 = vmatprep.subr.mxu0 0.0
    %632 = vmatpush1.msra.mxu0 0.0
    %633 = vmatprep.subr.mxu0 0.0
    %634 = vmatpush1.msra.mxu0 0.0
    %635 = vmatprep.subr.mxu0 0.0
    %636 = vmatpush1.msra.mxu0 0.0
    %637 = vmatprep.subr.mxu0 0.0
    %638 = vmatpush1.msra.mxu0 0.0
    %639 = vmatprep.subr.mxu0 0.0
    %640 = vmatpush1.msra.mxu0 0.0
    %641 = vmatprep.subr.mxu0 0.0
    %642 = vmatpush1.msra.mxu0 0.0
    %643 = vmatprep.mubr.f32.mxu0 0.0
    %644 = vmatmul.mubr.f32.gmra.mrb[0].mxu0 %v574
    %v645 = vpop.f32.mrb[0].mxu0
    %v646 = vadd.f32 0.0, %v645
    %v647 = vpop.f32.mrb[0].mxu0
    %648 = vmatprep.mubr.f32.mxu0 0.0
    %649 = vmatmul.mubr.f32.gmra.mrb[0].mxu0 %v577
    %v650 = vpop.f32.mrb[0].mxu0
    %v651 = vadd.f32 0.0, %v650
    %v652 = vpop.f32.mrb[0].mxu0
    %653 = vdwg.mxu0
    %654 = vxpose.xlu0.b32.start [1/16] %v69, 128
    %655 = vxpose.xlu0.b32.cont [2/16] 0.0, 128
    %656 = vxpose.xlu0.b32.cont [3/16] 0.0, 128
    %657 = vxpose.xlu0.b32.cont [4/16] 0.0, 128
    %658 = vxpose.xlu0.b32.cont [5/16] 0.0, 128
    %659 = vxpose.xlu0.b32.cont [6/16] 0.0, 128
    %660 = vxpose.xlu0.b32.cont [7/16] 0.0, 128
    %661 = vxpose.xlu0.b32.cont [8/16] 0.0, 128
    %662 = vxpose.xlu0.b32.cont [9/16] 0.0, 128
    %663 = vxpose.xlu0.b32.cont [10/16] 0.0, 128
    %664 = vxpose.xlu0.b32.cont [11/16] 0.0, 128
    %665 = vxpose.xlu0.b32.cont [12/16] 0.0, 128
    %666 = vxpose.xlu0.b32.cont [13/16] 0.0, 128
    %667 = vxpose.xlu0.b32.cont [14/16] 0.0, 128
    %668 = vxpose.xlu0.b32.cont [15/16] 0.0, 128
    %669 = vxpose.xlu0.b32.end [16/16] 0.0, 128
    %v670 = vpop.trf.xlu0
    %v671 = vpop.trf.xlu0
    %v672 = vpop.trf.xlu0
    %v673 = vpop.trf.xlu0
    %v674 = vpop.trf.xlu0
    %v675 = vpop.trf.xlu0
    %v676 = vpop.trf.xlu0
    %v677 = vpop.trf.xlu0
    %v678 = vpop.trf.xlu0
    %v679 = vpop.trf.xlu0
    %v680 = vpop.trf.xlu0
    %v681 = vpop.trf.xlu0
    %v682 = vpop.trf.xlu0
    %v683 = vpop.trf.xlu0
    %v684 = vpop.trf.xlu0
    %v685 = vpop.trf.xlu0
    %v687 = vsel %vm120, %v670, 0
    %v690 = vsel %vm120, %v671, 0
    %692 = vmatprep.subr.mxu0 0.0
    %693 = vmatpush1.msra.mxu0 %v77
    %694 = vmatprep.subr.mxu0 0.0
    %695 = vmatpush1.msra.mxu0 0.0
    %696 = vmatprep.subr.mxu0 0.0
    %697 = vmatpush1.msra.mxu0 0.0
    %698 = vmatprep.subr.mxu0 0.0
    %699 = vmatpush1.msra.mxu0 0.0
    %700 = vmatprep.subr.mxu0 0.0
    %701 = vmatpush1.msra.mxu0 0.0
    %702 = vmatprep.subr.mxu0 0.0
    %703 = vmatpush1.msra.mxu0 0.0
    %704 = vmatprep.subr.mxu0 0.0
    %705 = vmatpush1.msra.mxu0 0.0
    %706 = vmatprep.subr.mxu0 0.0
    %707 = vmatpush1.msra.mxu0 0.0
    %708 = vmatprep.subr.mxu0 0.0
    %709 = vmatpush1.msra.mxu0 0.0
    %710 = vmatprep.subr.mxu0 0.0
    %711 = vmatpush1.msra.mxu0 0.0
    %712 = vmatprep.subr.mxu0 0.0
    %713 = vmatpush1.msra.mxu0 0.0
    %714 = vmatprep.subr.mxu0 0.0
    %715 = vmatpush1.msra.mxu0 0.0
    %716 = vmatprep.subr.mxu0 0.0
    %717 = vmatpush1.msra.mxu0 0.0
    %718 = vmatprep.subr.mxu0 0.0
    %719 = vmatpush1.msra.mxu0 0.0
    %720 = vmatprep.subr.mxu0 0.0
    %721 = vmatpush1.msra.mxu0 0.0
    %722 = vmatprep.subr.mxu0 0.0
    %723 = vmatpush1.msra.mxu0 0.0
    %724 = vmatprep.subr.mxu0 0.0
    %725 = vmatpush1.msra.mxu0 0.0
    %726 = vmatprep.subr.mxu0 0.0
    %727 = vmatpush1.msra.mxu0 0.0
    %728 = vmatprep.subr.mxu0 0.0
    %729 = vmatpush1.msra.mxu0 0.0
    %730 = vmatprep.subr.mxu0 0.0
    %731 = vmatpush1.msra.mxu0 0.0
    %732 = vmatprep.subr.mxu0 0.0
    %733 = vmatpush1.msra.mxu0 0.0
    %734 = vmatprep.subr.mxu0 0.0
    %735 = vmatpush1.msra.mxu0 0.0
    %736 = vmatprep.subr.mxu0 0.0
    %737 = vmatpush1.msra.mxu0 0.0
    %738 = vmatprep.subr.mxu0 0.0
    %739 = vmatpush1.msra.mxu0 0.0
    %740 = vmatprep.subr.mxu0 0.0
    %741 = vmatpush1.msra.mxu0 0.0
    %742 = vmatprep.subr.mxu0 0.0
    %743 = vmatpush1.msra.mxu0 0.0
    %744 = vmatprep.subr.mxu0 0.0
    %745 = vmatpush1.msra.mxu0 0.0
    %746 = vmatprep.subr.mxu0 0.0
    %747 = vmatpush1.msra.mxu0 0.0
    %748 = vmatprep.subr.mxu0 0.0
    %749 = vmatpush1.msra.mxu0 0.0
    %750 = vmatprep.subr.mxu0 0.0
    %751 = vmatpush1.msra.mxu0 0.0
    %752 = vmatprep.subr.mxu0 0.0
    %753 = vmatpush1.msra.mxu0 0.0
    %754 = vmatprep.subr.mxu0 0.0
    %755 = vmatpush1.msra.mxu0 0.0
    %756 = vmatprep.mubr.f32.mxu0 0.0
    %757 = vmatmul.mubr.f32.gmra.mrb[0].mxu0 %v687
    %v758 = vpop.f32.mrb[0].mxu0
    %v759 = vadd.f32 0.0, %v758
    %v760 = vpop.f32.mrb[0].mxu0
    %761 = vmatprep.mubr.f32.mxu0 0.0
    %762 = vmatmul.mubr.f32.gmra.mrb[0].mxu0 %v690
    %v763 = vpop.f32.mrb[0].mxu0
    %v764 = vadd.f32 0.0, %v763
    %v765 = vpop.f32.mrb[0].mxu0
    %766 = vdwg.mxu0
    %767 = vxpose.xlu0.b32.start [1/16] %v70, 128
    %768 = vxpose.xlu0.b32.cont [2/16] 0.0, 128
    %769 = vxpose.xlu0.b32.cont [3/16] 0.0, 128
    %770 = vxpose.xlu0.b32.cont [4/16] 0.0, 128
    %771 = vxpose.xlu0.b32.cont [5/16] 0.0, 128
    %772 = vxpose.xlu0.b32.cont [6/16] 0.0, 128
    %773 = vxpose.xlu0.b32.cont [7/16] 0.0, 128
    %774 = vxpose.xlu0.b32.cont [8/16] 0.0, 128
    %775 = vxpose.xlu0.b32.cont [9/16] 0.0, 128
    %776 = vxpose.xlu0.b32.cont [10/16] 0.0, 128
    %777 = vxpose.xlu0.b32.cont [11/16] 0.0, 128
    %778 = vxpose.xlu0.b32.cont [12/16] 0.0, 128
    %779 = vxpose.xlu0.b32.cont [13/16] 0.0, 128
    %780 = vxpose.xlu0.b32.cont [14/16] 0.0, 128
    %781 = vxpose.xlu0.b32.cont [15/16] 0.0, 128
    %782 = vxpose.xlu0.b32.end [16/16] 0.0, 128
    %v783 = vpop.trf.xlu0
    %v784 = vpop.trf.xlu0
    %v785 = vpop.trf.xlu0
    %v786 = vpop.trf.xlu0
    %v787 = vpop.trf.xlu0
    %v788 = vpop.trf.xlu0
    %v789 = vpop.trf.xlu0
    %v790 = vpop.trf.xlu0
    %v791 = vpop.trf.xlu0
    %v792 = vpop.trf.xlu0
    %v793 = vpop.trf.xlu0
    %v794 = vpop.trf.xlu0
    %v795 = vpop.trf.xlu0
    %v796 = vpop.trf.xlu0
    %v797 = vpop.trf.xlu0
    %v798 = vpop.trf.xlu0
    %v800 = vsel %vm120, %v783, 0
    %v803 = vsel %vm120, %v784, 0
    %805 = vmatprep.subr.mxu0 0.0
    %806 = vmatpush1.msra.mxu0 %v78
    %807 = vmatprep.subr.mxu0 0.0
    %808 = vmatpush1.msra.mxu0 0.0
    %809 = vmatprep.subr.mxu0 0.0
    %810 = vmatpush1.msra.mxu0 0.0
    %811 = vmatprep.subr.mxu0 0.0
    %812 = vmatpush1.msra.mxu0 0.0
    %813 = vmatprep.subr.mxu0 0.0
    %814 = vmatpush1.msra.mxu0 0.0
    %815 = vmatprep.subr.mxu0 0.0
    %816 = vmatpush1.msra.mxu0 0.0
    %817 = vmatprep.subr.mxu0 0.0
    %818 = vmatpush1.msra.mxu0 0.0
    %819 = vmatprep.subr.mxu0 0.0
    %820 = vmatpush1.msra.mxu0 0.0
    %821 = vmatprep.subr.mxu0 0.0
    %822 = vmatpush1.msra.mxu0 0.0
    %823 = vmatprep.subr.mxu0 0.0
    %824 = vmatpush1.msra.mxu0 0.0
    %825 = vmatprep.subr.mxu0 0.0
    %826 = vmatpush1.msra.mxu0 0.0
    %827 = vmatprep.subr.mxu0 0.0
    %828 = vmatpush1.msra.mxu0 0.0
    %829 = vmatprep.subr.mxu0 0.0
    %830 = vmatpush1.msra.mxu0 0.0
    %831 = vmatprep.subr.mxu0 0.0
    %832 = vmatpush1.msra.mxu0 0.0
    %833 = vmatprep.subr.mxu0 0.0
    %834 = vmatpush1.msra.mxu0 0.0
    %835 = vmatprep.subr.mxu0 0.0
    %836 = vmatpush1.msra.mxu0 0.0
    %837 = vmatprep.subr.mxu0 0.0
    %838 = vmatpush1.msra.mxu0 0.0
    %839 = vmatprep.subr.mxu0 0.0
    %840 = vmatpush1.msra.mxu0 0.0
    %841 = vmatprep.subr.mxu0 0.0
    %842 = vmatpush1.msra.mxu0 0.0
    %843 = vmatprep.subr.mxu0 0.0
    %844 = vmatpush1.msra.mxu0 0.0
    %845 = vmatprep.subr.mxu0 0.0
    %846 = vmatpush1.msra.mxu0 0.0
    %847 = vmatprep.subr.mxu0 0.0
    %848 = vmatpush1.msra.mxu0 0.0
    %849 = vmatprep.subr.mxu0 0.0
    %850 = vmatpush1.msra.mxu0 0.0
    %851 = vmatprep.subr.mxu0 0.0
    %852 = vmatpush1.msra.mxu0 0.0
    %853 = vmatprep.subr.mxu0 0.0
    %854 = vmatpush1.msra.mxu0 0.0
    %855 = vmatprep.subr.mxu0 0.0
    %856 = vmatpush1.msra.mxu0 0.0
    %857 = vmatprep.subr.mxu0 0.0
    %858 = vmatpush1.msra.mxu0 0.0
    %859 = vmatprep.subr.mxu0 0.0
    %860 = vmatpush1.msra.mxu0 0.0
    %861 = vmatprep.subr.mxu0 0.0
    %862 = vmatpush1.msra.mxu0 0.0
    %863 = vmatprep.subr.mxu0 0.0
    %864 = vmatpush1.msra.mxu0 0.0
    %865 = vmatprep.subr.mxu0 0.0
    %866 = vmatpush1.msra.mxu0 0.0
    %867 = vmatprep.subr.mxu0 0.0
    %868 = vmatpush1.msra.mxu0 0.0
    %869 = vmatprep.mubr.f32.mxu0 0.0
    %870 = vmatmul.mubr.f32.gmra.mrb[0].mxu0 %v800
    %v871 = vpop.f32.mrb[0].mxu0
    %v872 = vadd.f32 0.0, %v871
    %v873 = vpop.f32.mrb[0].mxu0
    %874 = vmatprep.mubr.f32.mxu0 0.0
    %875 = vmatmul.mubr.f32.gmra.mrb[0].mxu0 %v803
    %v876 = vpop.f32.mrb[0].mxu0
    %v877 = vadd.f32 0.0, %v876
    %v878 = vpop.f32.mrb[0].mxu0
    %879 = vdwg.mxu0
    %880 = vxpose.xlu0.b32.start [1/16] %v71, 128
    %881 = vxpose.xlu0.b32.cont [2/16] 0.0, 128
    %882 = vxpose.xlu0.b32.cont [3/16] 0.0, 128
    %883 = vxpose.xlu0.b32.cont [4/16] 0.0, 128
    %884 = vxpose.xlu0.b32.cont [5/16] 0.0, 128
    %885 = vxpose.xlu0.b32.cont [6/16] 0.0, 128
    %886 = vxpose.xlu0.b32.cont [7/16] 0.0, 128
    %887 = vxpose.xlu0.b32.cont [8/16] 0.0, 128
    %888 = vxpose.xlu0.b32.cont [9/16] 0.0, 128
    %889 = vxpose.xlu0.b32.cont [10/16] 0.0, 128
    %890 = vxpose.xlu0.b32.cont [11/16] 0.0, 128
    %891 = vxpose.xlu0.b32.cont [12/16] 0.0, 128
    %892 = vxpose.xlu0.b32.cont [13/16] 0.0, 128
    %893 = vxpose.xlu0.b32.cont [14/16] 0.0, 128
    %894 = vxpose.xlu0.b32.cont [15/16] 0.0, 128
    %895 = vxpose.xlu0.b32.end [16/16] 0.0, 128
    %v896 = vpop.trf.xlu0
    %v897 = vpop.trf.xlu0
    %v898 = vpop.trf.xlu0
    %v899 = vpop.trf.xlu0
    %v900 = vpop.trf.xlu0
    %v901 = vpop.trf.xlu0
    %v902 = vpop.trf.xlu0
    %v903 = vpop.trf.xlu0
    %v904 = vpop.trf.xlu0
    %v905 = vpop.trf.xlu0
    %v906 = vpop.trf.xlu0
    %v907 = vpop.trf.xlu0
    %v908 = vpop.trf.xlu0
    %v909 = vpop.trf.xlu0
    %v910 = vpop.trf.xlu0
    %v911 = vpop.trf.xlu0
    %v913 = vsel %vm120, %v896, 0
    %v916 = vsel %vm120, %v897, 0
    %918 = vmatprep.subr.mxu0 0.0
    %919 = vmatpush1.msra.mxu0 %v79
    %920 = vmatprep.subr.mxu0 0.0
    %921 = vmatpush1.msra.mxu0 0.0
    %922 = vmatprep.subr.mxu0 0.0
    %923 = vmatpush1.msra.mxu0 0.0
    %924 = vmatprep.subr.mxu0 0.0
    %925 = vmatpush1.msra.mxu0 0.0
    %926 = vmatprep.subr.mxu0 0.0
    %927 = vmatpush1.msra.mxu0 0.0
    %928 = vmatprep.subr.mxu0 0.0
    %929 = vmatpush1.msra.mxu0 0.0
    %930 = vmatprep.subr.mxu0 0.0
    %931 = vmatpush1.msra.mxu0 0.0
    %932 = vmatprep.subr.mxu0 0.0
    %933 = vmatpush1.msra.mxu0 0.0
    %934 = vmatprep.subr.mxu0 0.0
    %935 = vmatpush1.msra.mxu0 0.0
    %936 = vmatprep.subr.mxu0 0.0
    %937 = vmatpush1.msra.mxu0 0.0
    %938 = vmatprep.subr.mxu0 0.0
    %939 = vmatpush1.msra.mxu0 0.0
    %940 = vmatprep.subr.mxu0 0.0
    %941 = vmatpush1.msra.mxu0 0.0
    %942 = vmatprep.subr.mxu0 0.0
    %943 = vmatpush1.msra.mxu0 0.0
    %944 = vmatprep.subr.mxu0 0.0
    %945 = vmatpush1.msra.mxu0 0.0
    %946 = vmatprep.subr.mxu0 0.0
    %947 = vmatpush1.msra.mxu0 0.0
    %948 = vmatprep.subr.mxu0 0.0
    %949 = vmatpush1.msra.mxu0 0.0
    %950 = vmatprep.subr.mxu0 0.0
    %951 = vmatpush1.msra.mxu0 0.0
    %952 = vmatprep.subr.mxu0 0.0
    %953 = vmatpush1.msra.mxu0 0.0
    %954 = vmatprep.subr.mxu0 0.0
    %955 = vmatpush1.msra.mxu0 0.0
    %956 = vmatprep.subr.mxu0 0.0
    %957 = vmatpush1.msra.mxu0 0.0
    %958 = vmatprep.subr.mxu0 0.0
    %959 = vmatpush1.msra.mxu0 0.0
    %960 = vmatprep.subr.mxu0 0.0
    %961 = vmatpush1.msra.mxu0 0.0
    %962 = vmatprep.subr.mxu0 0.0
    %963 = vmatpush1.msra.mxu0 0.0
    %964 = vmatprep.subr.mxu0 0.0
    %965 = vmatpush1.msra.mxu0 0.0
    %966 = vmatprep.subr.mxu0 0.0
    %967 = vmatpush1.msra.mxu0 0.0
    %968 = vmatprep.subr.mxu0 0.0
    %969 = vmatpush1.msra.mxu0 0.0
    %970 = vmatprep.subr.mxu0 0.0
    %971 = vmatpush1.msra.mxu0 0.0
    %972 = vmatprep.subr.mxu0 0.0
    %973 = vmatpush1.msra.mxu0 0.0
    %974 = vmatprep.subr.mxu0 0.0
    %975 = vmatpush1.msra.mxu0 0.0
    %976 = vmatprep.subr.mxu0 0.0
    %977 = vmatpush1.msra.mxu0 0.0
    %978 = vmatprep.subr.mxu0 0.0
    %979 = vmatpush1.msra.mxu0 0.0
    %980 = vmatprep.subr.mxu0 0.0
    %981 = vmatpush1.msra.mxu0 0.0
    %982 = vmatprep.mubr.f32.mxu0 0.0
    %983 = vmatmul.mubr.f32.gmra.mrb[0].mxu0 %v913
    %v984 = vpop.f32.mrb[0].mxu0
    %v985 = vadd.f32 0.0, %v984
    %v986 = vpop.f32.mrb[0].mxu0
    %987 = vmatprep.mubr.f32.mxu0 0.0
    %988 = vmatmul.mubr.f32.gmra.mrb[0].mxu0 %v916
    %v989 = vpop.f32.mrb[0].mxu0
    %v990 = vadd.f32 0.0, %v989
    %v991 = vpop.f32.mrb[0].mxu0
    %992 = vdwg.mxu0
    %vm993 = vcmask 130048
    %v994 = vsel %vm993, %v194, -inf
    %995 = vmax.xlane.f32.xlu0 %v994
    %v996 = vpop.xlane.xlu0 %995
    %v997 = vsel %vm993, %v199, -inf
    %998 = vmax.xlane.f32.xlu0 %v997
    %v999 = vpop.xlane.xlu0 %998
    %v1000 = vsel %vm993, %v307, -inf
    %1001 = vmax.xlane.f32.xlu0 %v1000
    %v1002 = vpop.xlane.xlu0 %1001
    %v1003 = vsel %vm993, %v312, -inf
    %1004 = vmax.xlane.f32.xlu0 %v1003
    %v1005 = vpop.xlane.xlu0 %1004
    %v1006 = vsel %vm993, %v420, -inf
    %1007 = vmax.xlane.f32.xlu0 %v1006
    %v1008 = vpop.xlane.xlu0 %1007
    %v1009 = vsel %vm993, %v425, -inf
    %1010 = vmax.xlane.f32.xlu0 %v1009
    %v1011 = vpop.xlane.xlu0 %1010
    %v1012 = vsel %vm993, %v533, -inf
    %1013 = vmax.xlane.f32.xlu0 %v1012
    %v1014 = vpop.xlane.xlu0 %1013
    %v1015 = vsel %vm993, %v538, -inf
    %1016 = vmax.xlane.f32.xlu0 %v1015
    %v1017 = vpop.xlane.xlu0 %1016
    %v1018 = vsel %vm993, %v646, -inf
    %1019 = vmax.xlane.f32.xlu0 %v1018
    %v1020 = vpop.xlane.xlu0 %1019
    %v1021 = vsel %vm993, %v651, -inf
    %1022 = vmax.xlane.f32.xlu0 %v1021
    %v1023 = vpop.xlane.xlu0 %1022
    %v1024 = vsel %vm993, %v759, -inf
    %1025 = vmax.xlane.f32.xlu0 %v1024
    %v1026 = vpop.xlane.xlu0 %1025
    %v1027 = vsel %vm993, %v764, -inf
    %1028 = vmax.xlane.f32.xlu0 %v1027
    %v1029 = vpop.xlane.xlu0 %1028
    %v1030 = vsel %vm993, %v872, -inf
    %1031 = vmax.xlane.f32.xlu0 %v1030
    %v1032 = vpop.xlane.xlu0 %1031
    %v1033 = vsel %vm993, %v877, -inf
    %1034 = vmax.xlane.f32.xlu0 %v1033
    %v1035 = vpop.xlane.xlu0 %1034
    %v1036 = vsel %vm993, %v985, -inf
    %1037 = vmax.xlane.f32.xlu0 %v1036
    %v1038 = vpop.xlane.xlu0 %1037
    %v1039 = vsel %vm993, %v990, -inf
    %1040 = vmax.xlane.f32.xlu0 %v1039
    %v1041 = vpop.xlane.xlu0 %1040
    %v1042 = vsub.f32 %v194, %v996
    %v1043 = vsub.f32 %v199, %v999
    %v1044 = vsub.f32 %v307, %v1002
    %v1045 = vsub.f32 %v312, %v1005
    %v1046 = vsub.f32 %v420, %v1008
    %v1047 = vsub.f32 %v425, %v1011
    %v1048 = vsub.f32 %v533, %v1014
    %v1049 = vsub.f32 %v538, %v1017
    %v1050 = vsub.f32 %v646, %v1020
    %v1051 = vsub.f32 %v651, %v1023
    %v1052 = vsub.f32 %v759, %v1026
    %v1053 = vsub.f32 %v764, %v1029
    %v1054 = vsub.f32 %v872, %v1032
    %v1055 = vsub.f32 %v877, %v1035
    %v1056 = vsub.f32 %v985, %v1038
    %v1057 = vsub.f32 %v990, %v1041
    %v1058 = vmul.f32 %v1042, 1.442695
    %v1059 = vpow.pop %v1058
    %v1060 = vmul.f32 %v1043, 1.442695
    %v1061 = vpow.pop %v1060
    %v1062 = vmul.f32 %v1044, 1.442695
    %v1063 = vpow.pop %v1062
    %v1064 = vmul.f32 %v1045, 1.442695
    %v1065 = vpow.pop %v1064
    %v1066 = vmul.f32 %v1046, 1.442695
    %v1067 = vpow.pop %v1066
    %v1068 = vmul.f32 %v1047, 1.442695
    %v1069 = vpow.pop %v1068
    %v1070 = vmul.f32 %v1048, 1.442695
    %v1071 = vpow.pop %v1070
    %v1072 = vmul.f32 %v1049, 1.442695
    %v1073 = vpow.pop %v1072
    %v1074 = vmul.f32 %v1050, 1.442695
    %v1075 = vpow.pop %v1074
    %v1076 = vmul.f32 %v1051, 1.442695
    %v1077 = vpow.pop %v1076
    %v1078 = vmul.f32 %v1052, 1.442695
    %v1079 = vpow.pop %v1078
    %v1080 = vmul.f32 %v1053, 1.442695
    %v1081 = vpow.pop %v1080
    %v1082 = vmul.f32 %v1054, 1.442695
    %v1083 = vpow.pop %v1082
    %v1084 = vmul.f32 %v1055, 1.442695
    %v1085 = vpow.pop %v1084
    %v1086 = vmul.f32 %v1056, 1.442695
    %v1087 = vpow.pop %v1086
    %v1088 = vmul.f32 %v1057, 1.442695
    %v1089 = vpow.pop %v1088
    %v1090 = vsel %vm993, %v1059, 0.0
    %1091 = vadd.xlane.f32.xlu0 %v1090
    %v1092 = vpop.xlane.xlu0 %1091
    %v1093 = vsel %vm993, %v1061, 0.0
    %1094 = vadd.xlane.f32.xlu0 %v1093
    %v1095 = vpop.xlane.xlu0 %1094
    %v1096 = vsel %vm993, %v1063, 0.0
    %1097 = vadd.xlane.f32.xlu0 %v1096
    %v1098 = vpop.xlane.xlu0 %1097
    %v1099 = vsel %vm993, %v1065, 0.0
    %1100 = vadd.xlane.f32.xlu0 %v1099
    %v1101 = vpop.xlane.xlu0 %1100
    %v1102 = vsel %vm993, %v1067, 0.0
    %1103 = vadd.xlane.f32.xlu0 %v1102
    %v1104 = vpop.xlane.xlu0 %1103
    %v1105 = vsel %vm993, %v1069, 0.0
    %1106 = vadd.xlane.f32.xlu0 %v1105
    %v1107 = vpop.xlane.xlu0 %1106
    %v1108 = vsel %vm993, %v1071, 0.0
    %1109 = vadd.xlane.f32.xlu0 %v1108
    %v1110 = vpop.xlane.xlu0 %1109
    %v1111 = vsel %vm993, %v1073, 0.0
    %1112 = vadd.xlane.f32.xlu0 %v1111
    %v1113 = vpop.xlane.xlu0 %1112
    %v1114 = vsel %vm993, %v1075, 0.0
    %1115 = vadd.xlane.f32.xlu0 %v1114
    %v1116 = vpop.xlane.xlu0 %1115
    %v1117 = vsel %vm993, %v1077, 0.0
    %1118 = vadd.xlane.f32.xlu0 %v1117
    %v1119 = vpop.xlane.xlu0 %1118
    %v1120 = vsel %vm993, %v1079, 0.0
    %1121 = vadd.xlane.f32.xlu0 %v1120
    %v1122 = vpop.xlane.xlu0 %1121
    %v1123 = vsel %vm993, %v1081, 0.0
    %1124 = vadd.xlane.f32.xlu0 %v1123
    %v1125 = vpop.xlane.xlu0 %1124
    %v1126 = vsel %vm993, %v1083, 0.0
    %1127 = vadd.xlane.f32.xlu0 %v1126
    %v1128 = vpop.xlane.xlu0 %1127
    %v1129 = vsel %vm993, %v1085, 0.0
    %1130 = vadd.xlane.f32.xlu0 %v1129
    %v1131 = vpop.xlane.xlu0 %1130
    %v1132 = vsel %vm993, %v1087, 0.0
    %1133 = vadd.xlane.f32.xlu0 %v1132
    %v1134 = vpop.xlane.xlu0 %1133
    %v1135 = vsel %vm993, %v1089, 0.0
    %1136 = vadd.xlane.f32.xlu0 %v1135
    %v1137 = vpop.xlane.xlu0 %1136
    %v1138 = vrcp.pop %v1092
    %v1139 = vmul.f32 %v1059, %v1138
    %v1140 = vrcp.pop %v1095
    %v1141 = vmul.f32 %v1061, %v1140
    %v1142 = vrcp.pop %v1098
    %v1143 = vmul.f32 %v1063, %v1142
    %v1144 = vrcp.pop %v1101
    %v1145 = vmul.f32 %v1065, %v1144
    %v1146 = vrcp.pop %v1104
    %v1147 = vmul.f32 %v1067, %v1146
    %v1148 = vrcp.pop %v1107
    %v1149 = vmul.f32 %v1069, %v1148
    %v1150 = vrcp.pop %v1110
    %v1151 = vmul.f32 %v1071, %v1150
    %v1152 = vrcp.pop %v1113
    %v1153 = vmul.f32 %v1073, %v1152
    %v1154 = vrcp.pop %v1116
    %v1155 = vmul.f32 %v1075, %v1154
    %v1156 = vrcp.pop %v1119
    %v1157 = vmul.f32 %v1077, %v1156
    %v1158 = vrcp.pop %v1122
    %v1159 = vmul.f32 %v1079, %v1158
    %v1160 = vrcp.pop %v1125
    %v1161 = vmul.f32 %v1081, %v1160
    %v1162 = vrcp.pop %v1128
    %v1163 = vmul.f32 %v1083, %v1162
    %v1164 = vrcp.pop %v1131
    %v1165 = vmul.f32 %v1085, %v1164
    %v1166 = vrcp.pop %v1134
    %v1167 = vmul.f32 %v1087, %v1166
    %v1168 = vrcp.pop %v1137
    %v1169 = vmul.f32 %v1089, %v1168
    %v1171 = vsel %vm993, %v80, 0
    %v1174 = vsel %vm993, %v1139, 0
    %v1177 = vsel %vm993, %v1141, 0
    %1179 = vmatprep.subr.mxu0 0.0
    %1180 = vmatpush1.xpose.msra.mxu0 %v1174
    %1181 = vmatprep.subr.mxu0 0.0
    %1182 = vmatpush1.xpose.msra.mxu0 %v1177
    %1183 = vmatprep.subr.mxu0 0.0
    %1184 = vmatpush1.xpose.msra.mxu0 0.0
    %1185 = vmatprep.subr.mxu0 0.0
    %1186 = vmatpush1.xpose.msra.mxu0 0.0
    %1187 = vmatprep.subr.mxu0 0.0
    %1188 = vmatpush1.xpose.msra.mxu0 0.0
    %1189 = vmatprep.subr.mxu0 0.0
    %1190 = vmatpush1.xpose.msra.mxu0 0.0
    %1191 = vmatprep.subr.mxu0 0.0
    %1192 = vmatpush1.xpose.msra.mxu0 0.0
    %1193 = vmatprep.subr.mxu0 0.0
    %1194 = vmatpush1.xpose.msra.mxu0 0.0
    %1195 = vmatprep.subr.mxu0 0.0
    %1196 = vmatpush1.xpose.msra.mxu0 0.0
    %1197 = vmatprep.subr.mxu0 0.0
    %1198 = vmatpush1.xpose.msra.mxu0 0.0
    %1199 = vmatprep.subr.mxu0 0.0
    %1200 = vmatpush1.xpose.msra.mxu0 0.0
    %1201 = vmatprep.subr.mxu0 0.0
    %1202 = vmatpush1.xpose.msra.mxu0 0.0
    %1203 = vmatprep.subr.mxu0 0.0
    %1204 = vmatpush1.xpose.msra.mxu0 0.0
    %1205 = vmatprep.subr.mxu0 0.0
    %1206 = vmatpush1.xpose.msra.mxu0 0.0
    %1207 = vmatprep.subr.mxu0 0.0
    %1208 = vmatpush1.xpose.msra.mxu0 0.0
    %1209 = vmatprep.subr.mxu0 0.0
    %1210 = vmatpush1.xpose.msra.mxu0 0.0
    %1211 = vmatprep.subr.mxu0 0.0
    %1212 = vmatpush1.xpose.msra.mxu0 0.0
    %1213 = vmatprep.subr.mxu0 0.0
    %1214 = vmatpush1.xpose.msra.mxu0 0.0
    %1215 = vmatprep.subr.mxu0 0.0
    %1216 = vmatpush1.xpose.msra.mxu0 0.0
    %1217 = vmatprep.subr.mxu0 0.0
    %1218 = vmatpush1.xpose.msra.mxu0 0.0
    %1219 = vmatprep.subr.mxu0 0.0
    %1220 = vmatpush1.xpose.msra.mxu0 0.0
    %1221 = vmatprep.subr.mxu0 0.0
    %1222 = vmatpush1.xpose.msra.mxu0 0.0
    %1223 = vmatprep.subr.mxu0 0.0
    %1224 = vmatpush1.xpose.msra.mxu0 0.0
    %1225 = vmatprep.subr.mxu0 0.0
    %1226 = vmatpush1.xpose.msra.mxu0 0.0
    %1227 = vmatprep.subr.mxu0 0.0
    %1228 = vmatpush1.xpose.msra.mxu0 0.0
    %1229 = vmatprep.subr.mxu0 0.0
    %1230 = vmatpush1.xpose.msra.mxu0 0.0
    %1231 = vmatprep.subr.mxu0 0.0
    %1232 = vmatpush1.xpose.msra.mxu0 0.0
    %1233 = vmatprep.subr.mxu0 0.0
    %1234 = vmatpush1.xpose.msra.mxu0 0.0
    %1235 = vmatprep.subr.mxu0 0.0
    %1236 = vmatpush1.xpose.msra.mxu0 0.0
    %1237 = vmatprep.subr.mxu0 0.0
    %1238 = vmatpush1.xpose.msra.mxu0 0.0
    %1239 = vmatprep.subr.mxu0 0.0
    %1240 = vmatpush1.xpose.msra.mxu0 0.0
    %1241 = vmatprep.subr.mxu0 0.0
    %1242 = vmatpush1.xpose.msra.mxu0 0.0
    %1243 = vmatprep.mubr.f32.mxu0 0.0
    %1244 = vmatmul.mubr.f32.gmra.mrb[0].mxu0 %v1171
    %v1245 = vpop.f32.mrb[0].mxu0
    %v1246 = vadd.f32 0.0, %v1245
    %v1247 = vpop.f32.mrb[0].mxu0
    %1248 = vdwg.mxu0
    %v1250 = vsel %vm993, %v81, 0
    %v1253 = vsel %vm993, %v1143, 0
    %v1256 = vsel %vm993, %v1145, 0
    %1258 = vmatprep.subr.mxu0 0.0
    %1259 = vmatpush1.xpose.msra.mxu0 %v1253
    %1260 = vmatprep.subr.mxu0 0.0
    %1261 = vmatpush1.xpose.msra.mxu0 %v1256
    %1262 = vmatprep.subr.mxu0 0.0
    %1263 = vmatpush1.xpose.msra.mxu0 0.0
    %1264 = vmatprep.subr.mxu0 0.0
    %1265 = vmatpush1.xpose.msra.mxu0 0.0
    %1266 = vmatprep.subr.mxu0 0.0
    %1267 = vmatpush1.xpose.msra.mxu0 0.0
    %1268 = vmatprep.subr.mxu0 0.0
    %1269 = vmatpush1.xpose.msra.mxu0 0.0
    %1270 = vmatprep.subr.mxu0 0.0
    %1271 = vmatpush1.xpose.msra.mxu0 0.0
    %1272 = vmatprep.subr.mxu0 0.0
    %1273 = vmatpush1.xpose.msra.mxu0 0.0
    %1274 = vmatprep.subr.mxu0 0.0
    %1275 = vmatpush1.xpose.msra.mxu0 0.0
    %1276 = vmatprep.subr.mxu0 0.0
    %1277 = vmatpush1.xpose.msra.mxu0 0.0
    %1278 = vmatprep.subr.mxu0 0.0
    %1279 = vmatpush1.xpose.msra.mxu0 0.0
    %1280 = vmatprep.subr.mxu0 0.0
    %1281 = vmatpush1.xpose.msra.mxu0 0.0
    %1282 = vmatprep.subr.mxu0 0.0
    %1283 = vmatpush1.xpose.msra.mxu0 0.0
    %1284 = vmatprep.subr.mxu0 0.0
    %1285 = vmatpush1.xpose.msra.mxu0 0.0
    %1286 = vmatprep.subr.mxu0 0.0
    %1287 = vmatpush1.xpose.msra.mxu0 0.0
    %1288 = vmatprep.subr.mxu0 0.0
    %1289 = vmatpush1.xpose.msra.mxu0 0.0
    %1290 = vmatprep.subr.mxu0 0.0
    %1291 = vmatpush1.xpose.msra.mxu0 0.0
    %1292 = vmatprep.subr.mxu0 0.0
    %1293 = vmatpush1.xpose.msra.mxu0 0.0
    %1294 = vmatprep.subr.mxu0 0.0
    %1295 = vmatpush1.xpose.msra.mxu0 0.0
    %1296 = vmatprep.subr.mxu0 0.0
    %1297 = vmatpush1.xpose.msra.mxu0 0.0
    %1298 = vmatprep.subr.mxu0 0.0
    %1299 = vmatpush1.xpose.msra.mxu0 0.0
    %1300 = vmatprep.subr.mxu0 0.0
    %1301 = vmatpush1.xpose.msra.mxu0 0.0
    %1302 = vmatprep.subr.mxu0 0.0
    %1303 = vmatpush1.xpose.msra.mxu0 0.0
    %1304 = vmatprep.subr.mxu0 0.0
    %1305 = vmatpush1.xpose.msra.mxu0 0.0
    %1306 = vmatprep.subr.mxu0 0.0
    %1307 = vmatpush1.xpose.msra.mxu0 0.0
    %1308 = vmatprep.subr.mxu0 0.0
    %1309 = vmatpush1.xpose.msra.mxu0 0.0
    %1310 = vmatprep.subr.mxu0 0.0
    %1311 = vmatpush1.xpose.msra.mxu0 0.0
    %1312 = vmatprep.subr.mxu0 0.0
    %1313 = vmatpush1.xpose.msra.mxu0 0.0
    %1314 = vmatprep.subr.mxu0 0.0
    %1315 = vmatpush1.xpose.msra.mxu0 0.0
    %1316 = vmatprep.subr.mxu0 0.0
    %1317 = vmatpush1.xpose.msra.mxu0 0.0
    %1318 = vmatprep.subr.mxu0 0.0
    %1319 = vmatpush1.xpose.msra.mxu0 0.0
    %1320 = vmatprep.subr.mxu0 0.0
    %1321 = vmatpush1.xpose.msra.mxu0 0.0
    %1322 = vmatprep.mubr.f32.mxu0 0.0
    %1323 = vmatmul.mubr.f32.gmra.mrb[0].mxu0 %v1250
    %v1324 = vpop.f32.mrb[0].mxu0
    %v1325 = vadd.f32 0.0, %v1324
    %v1326 = vpop.f32.mrb[0].mxu0
    %1327 = vdwg.mxu0
    %v1329 = vsel %vm993, %v82, 0
    %v1332 = vsel %vm993, %v1147, 0
    %v1335 = vsel %vm993, %v1149, 0
    %1337 = vmatprep.subr.mxu0 0.0
    %1338 = vmatpush1.xpose.msra.mxu0 %v1332
    %1339 = vmatprep.subr.mxu0 0.0
    %1340 = vmatpush1.xpose.msra.mxu0 %v1335
    %1341 = vmatprep.subr.mxu0 0.0
    %1342 = vmatpush1.xpose.msra.mxu0 0.0
    %1343 = vmatprep.subr.mxu0 0.0
    %1344 = vmatpush1.xpose.msra.mxu0 0.0
    %1345 = vmatprep.subr.mxu0 0.0
    %1346 = vmatpush1.xpose.msra.mxu0 0.0
    %1347 = vmatprep.subr.mxu0 0.0
    %1348 = vmatpush1.xpose.msra.mxu0 0.0
    %1349 = vmatprep.subr.mxu0 0.0
    %1350 = vmatpush1.xpose.msra.mxu0 0.0
    %1351 = vmatprep.subr.mxu0 0.0
    %1352 = vmatpush1.xpose.msra.mxu0 0.0
    %1353 = vmatprep.subr.mxu0 0.0
    %1354 = vmatpush1.xpose.msra.mxu0 0.0
    %1355 = vmatprep.subr.mxu0 0.0
    %1356 = vmatpush1.xpose.msra.mxu0 0.0
    %1357 = vmatprep.subr.mxu0 0.0
    %1358 = vmatpush1.xpose.msra.mxu0 0.0
    %1359 = vmatprep.subr.mxu0 0.0
    %1360 = vmatpush1.xpose.msra.mxu0 0.0
    %1361 = vmatprep.subr.mxu0 0.0
    %1362 = vmatpush1.xpose.msra.mxu0 0.0
    %1363 = vmatprep.subr.mxu0 0.0
    %1364 = vmatpush1.xpose.msra.mxu0 0.0
    %1365 = vmatprep.subr.mxu0 0.0
    %1366 = vmatpush1.xpose.msra.mxu0 0.0
    %1367 = vmatprep.subr.mxu0 0.0
    %1368 = vmatpush1.xpose.msra.mxu0 0.0
    %1369 = vmatprep.subr.mxu0 0.0
    %1370 = vmatpush1.xpose.msra.mxu0 0.0
    %1371 = vmatprep.subr.mxu0 0.0
    %1372 = vmatpush1.xpose.msra.mxu0 0.0
    %1373 = vmatprep.subr.mxu0 0.0
    %1374 = vmatpush1.xpose.msra.mxu0 0.0
    %1375 = vmatprep.subr.mxu0 0.0
    %1376 = vmatpush1.xpose.msra.mxu0 0.0
    %1377 = vmatprep.subr.mxu0 0.0
    %1378 = vmatpush1.xpose.msra.mxu0 0.0
    %1379 = vmatprep.subr.mxu0 0.0
    %1380 = vmatpush1.xpose.msra.mxu0 0.0
    %1381 = vmatprep.subr.mxu0 0.0
    %1382 = vmatpush1.xpose.msra.mxu0 0.0
    %1383 = vmatprep.subr.mxu0 0.0
    %1384 = vmatpush1.xpose.msra.mxu0 0.0
    %1385 = vmatprep.subr.mxu0 0.0
    %1386 = vmatpush1.xpose.msra.mxu0 0.0
    %1387 = vmatprep.subr.mxu0 0.0
    %1388 = vmatpush1.xpose.msra.mxu0 0.0
    %1389 = vmatprep.subr.mxu0 0.0
    %1390 = vmatpush1.xpose.msra.mxu0 0.0
    %1391 = vmatprep.subr.mxu0 0.0
    %1392 = vmatpush1.xpose.msra.mxu0 0.0
    %1393 = vmatprep.subr.mxu0 0.0
    %1394 = vmatpush1.xpose.msra.mxu0 0.0
    %1395 = vmatprep.subr.mxu0 0.0
    %1396 = vmatpush1.xpose.msra.mxu0 0.0
    %1397 = vmatprep.subr.mxu0 0.0
    %1398 = vmatpush1.xpose.msra.mxu0 0.0
    %1399 = vmatprep.subr.mxu0 0.0
    %1400 = vmatpush1.xpose.msra.mxu0 0.0
    %1401 = vmatprep.mubr.f32.mxu0 0.0
    %1402 = vmatmul.mubr.f32.gmra.mrb[0].mxu0 %v1329
    %v1403 = vpop.f32.mrb[0].mxu0
    %v1404 = vadd.f32 0.0, %v1403
    %v1405 = vpop.f32.mrb[0].mxu0
    %1406 = vdwg.mxu0
    %v1408 = vsel %vm993, %v83, 0
    %v1411 = vsel %vm993, %v1151, 0
    %v1414 = vsel %vm993, %v1153, 0
    %1416 = vmatprep.subr.mxu0 0.0
    %1417 = vmatpush1.xpose.msra.mxu0 %v1411
    %1418 = vmatprep.subr.mxu0 0.0
    %1419 = vmatpush1.xpose.msra.mxu0 %v1414
    %1420 = vmatprep.subr.mxu0 0.0
    %1421 = vmatpush1.xpose.msra.mxu0 0.0
    %1422 = vmatprep.subr.mxu0 0.0
    %1423 = vmatpush1.xpose.msra.mxu0 0.0
    %1424 = vmatprep.subr.mxu0 0.0
    %1425 = vmatpush1.xpose.msra.mxu0 0.0
    %1426 = vmatprep.subr.mxu0 0.0
    %1427 = vmatpush1.xpose.msra.mxu0 0.0
    %1428 = vmatprep.subr.mxu0 0.0
    %1429 = vmatpush1.xpose.msra.mxu0 0.0
    %1430 = vmatprep.subr.mxu0 0.0
    %1431 = vmatpush1.xpose.msra.mxu0 0.0
    %1432 = vmatprep.subr.mxu0 0.0
    %1433 = vmatpush1.xpose.msra.mxu0 0.0
    %1434 = vmatprep.subr.mxu0 0.0
    %1435 = vmatpush1.xpose.msra.mxu0 0.0
    %1436 = vmatprep.subr.mxu0 0.0
    %1437 = vmatpush1.xpose.msra.mxu0 0.0
    %1438 = vmatprep.subr.mxu0 0.0
    %1439 = vmatpush1.xpose.msra.mxu0 0.0
    %1440 = vmatprep.subr.mxu0 0.0
    %1441 = vmatpush1.xpose.msra.mxu0 0.0
    %1442 = vmatprep.subr.mxu0 0.0
    %1443 = vmatpush1.xpose.msra.mxu0 0.0
    %1444 = vmatprep.subr.mxu0 0.0
    %1445 = vmatpush1.xpose.msra.mxu0 0.0
    %1446 = vmatprep.subr.mxu0 0.0
    %1447 = vmatpush1.xpose.msra.mxu0 0.0
    %1448 = vmatprep.subr.mxu0 0.0
    %1449 = vmatpush1.xpose.msra.mxu0 0.0
    %1450 = vmatprep.subr.mxu0 0.0
    %1451 = vmatpush1.xpose.msra.mxu0 0.0
    %1452 = vmatprep.subr.mxu0 0.0
    %1453 = vmatpush1.xpose.msra.mxu0 0.0
    %1454 = vmatprep.subr.mxu0 0.0
    %1455 = vmatpush1.xpose.msra.mxu0 0.0
    %1456 = vmatprep.subr.mxu0 0.0
    %1457 = vmatpush1.xpose.msra.mxu0 0.0
    %1458 = vmatprep.subr.mxu0 0.0
    %1459 = vmatpush1.xpose.msra.mxu0 0.0
    %1460 = vmatprep.subr.mxu0 0.0
    %1461 = vmatpush1.xpose.msra.mxu0 0.0
    %1462 = vmatprep.subr.mxu0 0.0
    %1463 = vmatpush1.xpose.msra.mxu0 0.0
    %1464 = vmatprep.subr.mxu0 0.0
    %1465 = vmatpush1.xpose.msra.mxu0 0.0
    %1466 = vmatprep.subr.mxu0 0.0
    %1467 = vmatpush1.xpose.msra.mxu0 0.0
    %1468 = vmatprep.subr.mxu0 0.0
    %1469 = vmatpush1.xpose.msra.mxu0 0.0
    %1470 = vmatprep.subr.mxu0 0.0
    %1471 = vmatpush1.xpose.msra.mxu0 0.0
    %1472 = vmatprep.subr.mxu0 0.0
    %1473 = vmatpush1.xpose.msra.mxu0 0.0
    %1474 = vmatprep.subr.mxu0 0.0
    %1475 = vmatpush1.xpose.msra.mxu0 0.0
    %1476 = vmatprep.subr.mxu0 0.0
    %1477 = vmatpush1.xpose.msra.mxu0 0.0
    %1478 = vmatprep.subr.mxu0 0.0
    %1479 = vmatpush1.xpose.msra.mxu0 0.0
    %1480 = vmatprep.mubr.f32.mxu0 0.0
    %1481 = vmatmul.mubr.f32.gmra.mrb[0].mxu0 %v1408
    %v1482 = vpop.f32.mrb[0].mxu0
    %v1483 = vadd.f32 0.0, %v1482
    %v1484 = vpop.f32.mrb[0].mxu0
    %1485 = vdwg.mxu0
    %v1487 = vsel %vm993, %v84, 0
    %v1490 = vsel %vm993, %v1155, 0
    %v1493 = vsel %vm993, %v1157, 0
    %1495 = vmatprep.subr.mxu0 0.0
    %1496 = vmatpush1.xpose.msra.mxu0 %v1490
    %1497 = vmatprep.subr.mxu0 0.0
    %1498 = vmatpush1.xpose.msra.mxu0 %v1493
    %1499 = vmatprep.subr.mxu0 0.0
    %1500 = vmatpush1.xpose.msra.mxu0 0.0
    %1501 = vmatprep.subr.mxu0 0.0
    %1502 = vmatpush1.xpose.msra.mxu0 0.0
    %1503 = vmatprep.subr.mxu0 0.0
    %1504 = vmatpush1.xpose.msra.mxu0 0.0
    %1505 = vmatprep.subr.mxu0 0.0
    %1506 = vmatpush1.xpose.msra.mxu0 0.0
    %1507 = vmatprep.subr.mxu0 0.0
    %1508 = vmatpush1.xpose.msra.mxu0 0.0
    %1509 = vmatprep.subr.mxu0 0.0
    %1510 = vmatpush1.xpose.msra.mxu0 0.0
    %1511 = vmatprep.subr.mxu0 0.0
    %1512 = vmatpush1.xpose.msra.mxu0 0.0
    %1513 = vmatprep.subr.mxu0 0.0
    %1514 = vmatpush1.xpose.msra.mxu0 0.0
    %1515 = vmatprep.subr.mxu0 0.0
    %1516 = vmatpush1.xpose.msra.mxu0 0.0
    %1517 = vmatprep.subr.mxu0 0.0
    %1518 = vmatpush1.xpose.msra.mxu0 0.0
    %1519 = vmatprep.subr.mxu0 0.0
    %1520 = vmatpush1.xpose.msra.mxu0 0.0
    %1521 = vmatprep.subr.mxu0 0.0
    %1522 = vmatpush1.xpose.msra.mxu0 0.0
    %1523 = vmatprep.subr.mxu0 0.0
    %1524 = vmatpush1.xpose.msra.mxu0 0.0
    %1525 = vmatprep.subr.mxu0 0.0
    %1526 = vmatpush1.xpose.msra.mxu0 0.0
    %1527 = vmatprep.subr.mxu0 0.0
    %1528 = vmatpush1.xpose.msra.mxu0 0.0
    %1529 = vmatprep.subr.mxu0 0.0
    %1530 = vmatpush1.xpose.msra.mxu0 0.0
    %1531 = vmatprep.subr.mxu0 0.0
    %1532 = vmatpush1.xpose.msra.mxu0 0.0
    %1533 = vmatprep.subr.mxu0 0.0
    %1534 = vmatpush1.xpose.msra.mxu0 0.0
    %1535 = vmatprep.subr.mxu0 0.0
    %1536 = vmatpush1.xpose.msra.mxu0 0.0
    %1537 = vmatprep.subr.mxu0 0.0
    %1538 = vmatpush1.xpose.msra.mxu0 0.0
    %1539 = vmatprep.subr.mxu0 0.0
    %1540 = vmatpush1.xpose.msra.mxu0 0.0
    %1541 = vmatprep.subr.mxu0 0.0
    %1542 = vmatpush1.xpose.msra.mxu0 0.0
    %1543 = vmatprep.subr.mxu0 0.0
    %1544 = vmatpush1.xpose.msra.mxu0 0.0
    %1545 = vmatprep.subr.mxu0 0.0
    %1546 = vmatpush1.xpose.msra.mxu0 0.0
    %1547 = vmatprep.subr.mxu0 0.0
    %1548 = vmatpush1.xpose.msra.mxu0 0.0
    %1549 = vmatprep.subr.mxu0 0.0
    %1550 = vmatpush1.xpose.msra.mxu0 0.0
    %1551 = vmatprep.subr.mxu0 0.0
    %1552 = vmatpush1.xpose.msra.mxu0 0.0
    %1553 = vmatprep.subr.mxu0 0.0
    %1554 = vmatpush1.xpose.msra.mxu0 0.0
    %1555 = vmatprep.subr.mxu0 0.0
    %1556 = vmatpush1.xpose.msra.mxu0 0.0
    %1557 = vmatprep.subr.mxu0 0.0
    %1558 = vmatpush1.xpose.msra.mxu0 0.0
    %1559 = vmatprep.mubr.f32.mxu0 0.0
    %1560 = vmatmul.mubr.f32.gmra.mrb[0].mxu0 %v1487
    %v1561 = vpop.f32.mrb[0].mxu0
    %v1562 = vadd.f32 0.0, %v1561
    %v1563 = vpop.f32.mrb[0].mxu0
    %1564 = vdwg.mxu0
    %v1566 = vsel %vm993, %v85, 0
    %v1569 = vsel %vm993, %v1159, 0
    %v1572 = vsel %vm993, %v1161, 0
    %1574 = vmatprep.subr.mxu0 0.0
    %1575 = vmatpush1.xpose.msra.mxu0 %v1569
    %1576 = vmatprep.subr.mxu0 0.0
    %1577 = vmatpush1.xpose.msra.mxu0 %v1572
    %1578 = vmatprep.subr.mxu0 0.0
    %1579 = vmatpush1.xpose.msra.mxu0 0.0
    %1580 = vmatprep.subr.mxu0 0.0
    %1581 = vmatpush1.xpose.msra.mxu0 0.0
    %1582 = vmatprep.subr.mxu0 0.0
    %1583 = vmatpush1.xpose.msra.mxu0 0.0
    %1584 = vmatprep.subr.mxu0 0.0
    %1585 = vmatpush1.xpose.msra.mxu0 0.0
    %1586 = vmatprep.subr.mxu0 0.0
    %1587 = vmatpush1.xpose.msra.mxu0 0.0
    %1588 = vmatprep.subr.mxu0 0.0
    %1589 = vmatpush1.xpose.msra.mxu0 0.0
    %1590 = vmatprep.subr.mxu0 0.0
    %1591 = vmatpush1.xpose.msra.mxu0 0.0
    %1592 = vmatprep.subr.mxu0 0.0
    %1593 = vmatpush1.xpose.msra.mxu0 0.0
    %1594 = vmatprep.subr.mxu0 0.0
    %1595 = vmatpush1.xpose.msra.mxu0 0.0
    %1596 = vmatprep.subr.mxu0 0.0
    %1597 = vmatpush1.xpose.msra.mxu0 0.0
    %1598 = vmatprep.subr.mxu0 0.0
    %1599 = vmatpush1.xpose.msra.mxu0 0.0
    %1600 = vmatprep.subr.mxu0 0.0
    %1601 = vmatpush1.xpose.msra.mxu0 0.0
    %1602 = vmatprep.subr.mxu0 0.0
    %1603 = vmatpush1.xpose.msra.mxu0 0.0
    %1604 = vmatprep.subr.mxu0 0.0
    %1605 = vmatpush1.xpose.msra.mxu0 0.0
    %1606 = vmatprep.subr.mxu0 0.0
    %1607 = vmatpush1.xpose.msra.mxu0 0.0
    %1608 = vmatprep.subr.mxu0 0.0
    %1609 = vmatpush1.xpose.msra.mxu0 0.0
    %1610 = vmatprep.subr.mxu0 0.0
    %1611 = vmatpush1.xpose.msra.mxu0 0.0
    %1612 = vmatprep.subr.mxu0 0.0
    %1613 = vmatpush1.xpose.msra.mxu0 0.0
    %1614 = vmatprep.subr.mxu0 0.0
    %1615 = vmatpush1.xpose.msra.mxu0 0.0
    %1616 = vmatprep.subr.mxu0 0.0
    %1617 = vmatpush1.xpose.msra.mxu0 0.0
    %1618 = vmatprep.subr.mxu0 0.0
    %1619 = vmatpush1.xpose.msra.mxu0 0.0
    %1620 = vmatprep.subr.mxu0 0.0
    %1621 = vmatpush1.xpose.msra.mxu0 0.0
    %1622 = vmatprep.subr.mxu0 0.0
    %1623 = vmatpush1.xpose.msra.mxu0 0.0
    %1624 = vmatprep.subr.mxu0 0.0
    %1625 = vmatpush1.xpose.msra.mxu0 0.0
    %1626 = vmatprep.subr.mxu0 0.0
    %1627 = vmatpush1.xpose.msra.mxu0 0.0
    %1628 = vmatprep.subr.mxu0 0.0
    %1629 = vmatpush1.xpose.msra.mxu0 0.0
    %1630 = vmatprep.subr.mxu0 0.0
    %1631 = vmatpush1.xpose.msra.mxu0 0.0
    %1632 = vmatprep.subr.mxu0 0.0
    %1633 = vmatpush1.xpose.msra.mxu0 0.0
    %1634 = vmatprep.subr.mxu0 0.0
    %1635 = vmatpush1.xpose.msra.mxu0 0.0
    %1636 = vmatprep.subr.mxu0 0.0
    %1637 = vmatpush1.xpose.msra.mxu0 0.0
    %1638 = vmatprep.mubr.f32.mxu0 0.0
    %1639 = vmatmul.mubr.f32.gmra.mrb[0].mxu0 %v1566
    %v1640 = vpop.f32.mrb[0].mxu0
    %v1641 = vadd.f32 0.0, %v1640
    %v1642 = vpop.f32.mrb[0].mxu0
    %1643 = vdwg.mxu0
    %v1645 = vsel %vm993, %v86, 0
    %v1648 = vsel %vm993, %v1163, 0
    %v1651 = vsel %vm993, %v1165, 0
    %1653 = vmatprep.subr.mxu0 0.0
    %1654 = vmatpush1.xpose.msra.mxu0 %v1648
    %1655 = vmatprep.subr.mxu0 0.0
    %1656 = vmatpush1.xpose.msra.mxu0 %v1651
    %1657 = vmatprep.subr.mxu0 0.0
    %1658 = vmatpush1.xpose.msra.mxu0 0.0
    %1659 = vmatprep.subr.mxu0 0.0
    %1660 = vmatpush1.xpose.msra.mxu0 0.0
    %1661 = vmatprep.subr.mxu0 0.0
    %1662 = vmatpush1.xpose.msra.mxu0 0.0
    %1663 = vmatprep.subr.mxu0 0.0
    %1664 = vmatpush1.xpose.msra.mxu0 0.0
    %1665 = vmatprep.subr.mxu0 0.0
    %1666 = vmatpush1.xpose.msra.mxu0 0.0
    %1667 = vmatprep.subr.mxu0 0.0
    %1668 = vmatpush1.xpose.msra.mxu0 0.0
    %1669 = vmatprep.subr.mxu0 0.0
    %1670 = vmatpush1.xpose.msra.mxu0 0.0
    %1671 = vmatprep.subr.mxu0 0.0
    %1672 = vmatpush1.xpose.msra.mxu0 0.0
    %1673 = vmatprep.subr.mxu0 0.0
    %1674 = vmatpush1.xpose.msra.mxu0 0.0
    %1675 = vmatprep.subr.mxu0 0.0
    %1676 = vmatpush1.xpose.msra.mxu0 0.0
    %1677 = vmatprep.subr.mxu0 0.0
    %1678 = vmatpush1.xpose.msra.mxu0 0.0
    %1679 = vmatprep.subr.mxu0 0.0
    %1680 = vmatpush1.xpose.msra.mxu0 0.0
    %1681 = vmatprep.subr.mxu0 0.0
    %1682 = vmatpush1.xpose.msra.mxu0 0.0
    %1683 = vmatprep.subr.mxu0 0.0
    %1684 = vmatpush1.xpose.msra.mxu0 0.0
    %1685 = vmatprep.subr.mxu0 0.0
    %1686 = vmatpush1.xpose.msra.mxu0 0.0
    %1687 = vmatprep.subr.mxu0 0.0
    %1688 = vmatpush1.xpose.msra.mxu0 0.0
    %1689 = vmatprep.subr.mxu0 0.0
    %1690 = vmatpush1.xpose.msra.mxu0 0.0
    %1691 = vmatprep.subr.mxu0 0.0
    %1692 = vmatpush1.xpose.msra.mxu0 0.0
    %1693 = vmatprep.subr.mxu0 0.0
    %1694 = vmatpush1.xpose.msra.mxu0 0.0
    %1695 = vmatprep.subr.mxu0 0.0
    %1696 = vmatpush1.xpose.msra.mxu0 0.0
    %1697 = vmatprep.subr.mxu0 0.0
    %1698 = vmatpush1.xpose.msra.mxu0 0.0
    %1699 = vmatprep.subr.mxu0 0.0
    %1700 = vmatpush1.xpose.msra.mxu0 0.0
    %1701 = vmatprep.subr.mxu0 0.0
    %1702 = vmatpush1.xpose.msra.mxu0 0.0
    %1703 = vmatprep.subr.mxu0 0.0
    %1704 = vmatpush1.xpose.msra.mxu0 0.0
    %1705 = vmatprep.subr.mxu0 0.0
    %1706 = vmatpush1.xpose.msra.mxu0 0.0
    %1707 = vmatprep.subr.mxu0 0.0
    %1708 = vmatpush1.xpose.msra.mxu0 0.0
    %1709 = vmatprep.subr.mxu0 0.0
    %1710 = vmatpush1.xpose.msra.mxu0 0.0
    %1711 = vmatprep.subr.mxu0 0.0
    %1712 = vmatpush1.xpose.msra.mxu0 0.0
    %1713 = vmatprep.subr.mxu0 0.0
    %1714 = vmatpush1.xpose.msra.mxu0 0.0
    %1715 = vmatprep.subr.mxu0 0.0
    %1716 = vmatpush1.xpose.msra.mxu0 0.0
    %1717 = vmatprep.mubr.f32.mxu0 0.0
    %1718 = vmatmul.mubr.f32.gmra.mrb[0].mxu0 %v1645
    %v1719 = vpop.f32.mrb[0].mxu0
    %v1720 = vadd.f32 0.0, %v1719
    %v1721 = vpop.f32.mrb[0].mxu0
    %1722 = vdwg.mxu0
    %v1724 = vsel %vm993, %v87, 0
    %v1727 = vsel %vm993, %v1167, 0
    %v1730 = vsel %vm993, %v1169, 0
    %1732 = vmatprep.subr.mxu0 0.0
    %1733 = vmatpush1.xpose.msra.mxu0 %v1727
    %1734 = vmatprep.subr.mxu0 0.0
    %1735 = vmatpush1.xpose.msra.mxu0 %v1730
    %1736 = vmatprep.subr.mxu0 0.0
    %1737 = vmatpush1.xpose.msra.mxu0 0.0
    %1738 = vmatprep.subr.mxu0 0.0
    %1739 = vmatpush1.xpose.msra.mxu0 0.0
    %1740 = vmatprep.subr.mxu0 0.0
    %1741 = vmatpush1.xpose.msra.mxu0 0.0
    %1742 = vmatprep.subr.mxu0 0.0
    %1743 = vmatpush1.xpose.msra.mxu0 0.0
    %1744 = vmatprep.subr.mxu0 0.0
    %1745 = vmatpush1.xpose.msra.mxu0 0.0
    %1746 = vmatprep.subr.mxu0 0.0
    %1747 = vmatpush1.xpose.msra.mxu0 0.0
    %1748 = vmatprep.subr.mxu0 0.0
    %1749 = vmatpush1.xpose.msra.mxu0 0.0
    %1750 = vmatprep.subr.mxu0 0.0
    %1751 = vmatpush1.xpose.msra.mxu0 0.0
    %1752 = vmatprep.subr.mxu0 0.0
    %1753 = vmatpush1.xpose.msra.mxu0 0.0
    %1754 = vmatprep.subr.mxu0 0.0
    %1755 = vmatpush1.xpose.msra.mxu0 0.0
    %1756 = vmatprep.subr.mxu0 0.0
    %1757 = vmatpush1.xpose.msra.mxu0 0.0
    %1758 = vmatprep.subr.mxu0 0.0
    %1759 = vmatpush1.xpose.msra.mxu0 0.0
    %1760 = vmatprep.subr.mxu0 0.0
    %1761 = vmatpush1.xpose.msra.mxu0 0.0
    %1762 = vmatprep.subr.mxu0 0.0
    %1763 = vmatpush1.xpose.msra.mxu0 0.0
    %1764 = vmatprep.subr.mxu0 0.0
    %1765 = vmatpush1.xpose.msra.mxu0 0.0
    %1766 = vmatprep.subr.mxu0 0.0
    %1767 = vmatpush1.xpose.msra.mxu0 0.0
    %1768 = vmatprep.subr.mxu0 0.0
    %1769 = vmatpush1.xpose.msra.mxu0 0.0
    %1770 = vmatprep.subr.mxu0 0.0
    %1771 = vmatpush1.xpose.msra.mxu0 0.0
    %1772 = vmatprep.subr.mxu0 0.0
    %1773 = vmatpush1.xpose.msra.mxu0 0.0
    %1774 = vmatprep.subr.mxu0 0.0
    %1775 = vmatpush1.xpose.msra.mxu0 0.0
    %1776 = vmatprep.subr.mxu0 0.0
    %1777 = vmatpush1.xpose.msra.mxu0 0.0
    %1778 = vmatprep.subr.mxu0 0.0
    %1779 = vmatpush1.xpose.msra.mxu0 0.0
    %1780 = vmatprep.subr.mxu0 0.0
    %1781 = vmatpush1.xpose.msra.mxu0 0.0
    %1782 = vmatprep.subr.mxu0 0.0
    %1783 = vmatpush1.xpose.msra.mxu0 0.0
    %1784 = vmatprep.subr.mxu0 0.0
    %1785 = vmatpush1.xpose.msra.mxu0 0.0
    %1786 = vmatprep.subr.mxu0 0.0
    %1787 = vmatpush1.xpose.msra.mxu0 0.0
    %1788 = vmatprep.subr.mxu0 0.0
    %1789 = vmatpush1.xpose.msra.mxu0 0.0
    %1790 = vmatprep.subr.mxu0 0.0
    %1791 = vmatpush1.xpose.msra.mxu0 0.0
    %1792 = vmatprep.subr.mxu0 0.0
    %1793 = vmatpush1.xpose.msra.mxu0 0.0
    %1794 = vmatprep.subr.mxu0 0.0
    %1795 = vmatpush1.xpose.msra.mxu0 0.0
    %1796 = vmatprep.mubr.f32.mxu0 0.0
    %1797 = vmatmul.mubr.f32.gmra.mrb[0].mxu0 %v1724
    %v1798 = vpop.f32.mrb[0].mxu0
    %v1799 = vadd.f32 0.0, %v1798
    %v1800 = vpop.f32.mrb[0].mxu0
    %1801 = vdwg.mxu0
    %1802 = vst.msk [vmem:[#allocation8] sm:$0xff] %vm993, %v1246
    %1803 = vst.msk [vmem:[#allocation8 + $0x8] sm:$0xff] %vm993, %v1325
    %1804 = vst.msk [vmem:[#allocation8 + $0x10] sm:$0xff] %vm993, %v1404
    %1805 = vst.msk [vmem:[#allocation8 + $0x18] sm:$0xff] %vm993, %v1483
    %1806 = vst.msk [vmem:[#allocation8 + $0x20] sm:$0xff] %vm993, %v1562
    %1807 = vst.msk [vmem:[#allocation8 + $0x28] sm:$0xff] %vm993, %v1641
    %1808 = vst.msk [vmem:[#allocation8 + $0x30] sm:$0xff] %vm993, %v1720
    %1809 = vst.msk [vmem:[#allocation8 + $0x38] sm:$0xff] %vm993, %v1799
    // Predicated region
    $region26: #{tpu_custom_call.1} parent=1 // pred_check
      _
    $region27: #{tpu_custom_call.1} parent=1 // pred_check_branch
      %1811 = sbr.rel (0) target = $region29
    $region28: #{tpu_custom_call.1} parent=1 // pred_region
      %s1813 = ssub.s32 1024, 1024
      %1814 = vsyncadd [#allocation4], %s1813
      %s1815 = sshll.u32 [#allocation8], 4
      %s1816 = int_to_ptr.vmem [resolvable:$true] %s1815
      %1821 = dma.vmem_to_hbm [thread:$0]  %s1816, 1024, %s3, [#allocation4], 128, 128, 8
    $region29: #{tpu_custom_call.1} parent=1 // pred_fallthru
      _
    // Predicated region
    $region30: #{tpu_custom_call.1} parent=1 // pred_check
      _
    $region31: #{tpu_custom_call.1} parent=1 // pred_check_branch
      %1823 = sbr.rel (0) target = $region33
    $region32: #{tpu_custom_call.1} parent=1 // pred_region
      %1824 = dma.done [#allocation4], 1024
    $region33: #{tpu_custom_call.1} parent=1 // pred_fallthru
      _
    %1825 = vsyncpa [#allocation3], 1
    %1826 = vsyncpa [#allocation6], 1
    %1827 = vsyncpa [#allocation4], 1

</llo_original>
